<compile_context>
chip_gen: v7x
topology: tpu7x:2x2x1
jax: 0.10.0
libtpu: 0.0.40
codegen_flags: <defaults>
</compile_context>

<pallas_src>
import functools

import jax
import jax.numpy as jnp
import numpy as np
from jax import lax
from jax.experimental import pallas as pl
from jax.experimental.pallas import tpu as pltpu


def _fused_var_estimate_kernel(x_ref, w1_ref, b1_ref, w2_ref, b2_ref,
                               w3_ref, b3_ref, o_ref, gbuf, ibuf, *, H, W, K):
    """One batch element per grid step: 3 x (KxK 'same' conv + ELU), all in VMEM.

    gbuf : (Cin, Lg) guard buffer holding the zero-padded image, flattened as
           j = h*Wp + w with Wp = W+2p, plus a guard margin G = p*Wp+p on each
           side so every tap slice gbuf[:, kh*Wp+kw : kh*Wp+kw+L] is in bounds.
    ibuf : (K*K*Cin, L) im2col staging buffer (VMEM only).
    """
    p = K // 2
    Wp, Hp = W + 2 * p, H + 2 * p
    L = Hp * Wp                      # flattened padded image length
    G = p * Wp + p                   # guard margin
    Cin = gbuf.shape[0]

    # Zero the guard buffer once per image; afterwards only interior pixels are
    # ever written, so the zero 'same'-padding ring is preserved between layers.
    gbuf[...] = jnp.zeros_like(gbuf)
    x = x_ref[0].astype(jnp.float32)                     # (Cin, H*W) lane-dense load
    for hh in range(H):
        dst = G + (hh + p) * Wp + p
        gbuf[:, dst:dst + W] = x[:, hh * W:(hh + 1) * W]

    def conv_elu(w_ref, b_ref):
        # Build the im2col operand from static shifted lane-slices of the
        # VMEM-resident padded tile (no HBM traffic) and fold all K*K taps
        # into a single MXU contraction of depth K*K*Cin.
        for kh in range(K):
            for kw in range(K):
                t = kh * K + kw
                s = kh * Wp + kw
                ibuf[t * Cin:(t + 1) * Cin, :] = gbuf[:, s:s + L]
        acc = jnp.dot(w_ref[...], ibuf[...],             # (Cout, L): lane-dense
                      preferred_element_type=jnp.float32)
        acc = acc + b_ref[...]                           # bias (Cout, 1)
        # ELU(alpha=1); min() keeps exp() finite in the discarded branch.
        # TODO(synk): switch to jnp.expm1 once its Mosaic lowering is confirmed
        # (this form differs from torch ELU by <= ~1e-7 abs just below zero).
        return jnp.where(acc > 0.0, acc, jnp.exp(jnp.minimum(acc, 0.0)) - 1.0)

    def writeback_interior(act):                         # act: (Cin, L), padded layout
        # Copy only interior pixels back; the padding ring stays zero, which is
        # exactly the 'same' padding the next layer needs.
        for hh in range(H):
            s = (hh + p) * Wp + p
            gbuf[:, G + s:G + s + W] = act[:, s:s + W]

    # Fused layers: inter-layer activations never leave VMEM.
    writeback_interior(conv_elu(w1_ref, b1_ref))
    writeback_interior(conv_elu(w2_ref, b2_ref))
    a3 = conv_elu(w3_ref, b3_ref)                        # (Cout, L)

    # Strip the padding ring and store lane-dense (Cout, H*W).
    for hh in range(H):
        s = (hh + p) * Wp + p
        o_ref[0, :, hh * W:(hh + 1) * W] = a3[:, s:s + W].astype(o_ref.dtype)


def var_estimate_forward(x_nchw, params):
    """Forward pass of VarEstimateModule: 3 x (conv2d 'same' + ELU), one fused Pallas call."""
    n, ci, h, wd = x_nchw.shape
    k = params[0][0].shape[0]
    co = params[-1][0].shape[-1]
    p = k // 2
    hp, wp = h + 2 * p, wd + 2 * p
    L = hp * wp
    G = p * wp + p
    Lg = L + 2 * G

    # Free metadata reshape: channels on sublanes, flattened spatial on lanes.
    x_flat = x_nchw.reshape(n, ci, h * wd)

    # Weights -> (Cout, K*K*Cin) so out = Wmat @ im2col is (Cout, M) lane-dense.
    wmats, bcols = [], []
    for (wgt, b) in params:
        cin_l, cout_l = wgt.shape[2], wgt.shape[3]
        wmats.append(jnp.transpose(wgt.reshape(k * k * cin_l, cout_l)))
        bcols.append(b.reshape(cout_l, 1))

    kernel = functools.partial(_fused_var_estimate_kernel, H=h, W=wd, K=k)

    out_flat = pl.pallas_call(
        kernel,
        out_shape=jax.ShapeDtypeStruct((n, co, h * wd), x_nchw.dtype),
        grid=(n,),   # one image per grid step; pipelined / megacore-parallel over batch
        in_specs=[
            pl.BlockSpec((1, ci, h * wd), lambda b: (b, 0, 0)),
            pl.BlockSpec(wmats[0].shape, lambda b: (0, 0)),
            pl.BlockSpec(bcols[0].shape, lambda b: (0, 0)),
            pl.BlockSpec(wmats[1].shape, lambda b: (0, 0)),
            pl.BlockSpec(bcols[1].shape, lambda b: (0, 0)),
            pl.BlockSpec(wmats[2].shape, lambda b: (0, 0)),
            pl.BlockSpec(bcols[2].shape, lambda b: (0, 0)),
        ],
        out_specs=pl.BlockSpec((1, co, h * wd), lambda b: (b, 0, 0)),
        scratch_shapes=[pltpu.VMEM((ci, Lg), jnp.float32),          # padded guard buffer
                        pltpu.VMEM((k * k * ci, L), jnp.float32)],  # im2col staging
        compiler_params=pltpu.CompilerParams(
            dimension_semantics=("parallel",),
            vmem_limit_bytes=32 * 1024 * 1024),
    )(x_flat, wmats[0], bcols[0], wmats[1], bcols[1], wmats[2], bcols[2])

    return out_flat.reshape(n, co, h, wd)


def init_params(in_channel, out_channel, kernel_size, key):
    """Deterministic synthetic init, PyTorch-conv-like uniform(-1/sqrt(fan_in), ...)."""
    chans = [(in_channel, in_channel),
             (in_channel, in_channel),
             (in_channel, out_channel)]
    params = []
    for i, (ci, co) in enumerate(chans):
        kw_key, kb_key = jax.random.split(jax.random.fold_in(key, i))
        bound = 1.0 / np.sqrt(ci * kernel_size * kernel_size)
        w = jax.random.uniform(kw_key, (kernel_size, kernel_size, ci, co),
                               jnp.float32, -bound, bound)   # HWIO
        b = jax.random.uniform(kb_key, (co,), jnp.float32, -bound, bound)
        params.append((w, b))
    return params


def _reference_forward(x_nchw, params):
    """Pure-JAX reference (matches PyTorch Conv2d + ELU semantics, expm1 ELU)."""
    x = x_nchw
    for (w, b) in params:
        k = w.shape[0]
        p = k // 2
        x = lax.conv_general_dilated(
            x, w, window_strides=(1, 1), padding=[(p, p), (p, p)],
            dimension_numbers=("NCHW", "HWIO", "NCHW"),
            precision=lax.Precision.HIGHEST)
        x = x + b[None, :, None, None]
        x = jnp.where(x > 0, x, jnp.expm1(x))
    return x


if __name__ == "__main__":
    key = jax.random.PRNGKey(0)
    in_channel, out_channel, kernel_size = 4, 4, 3
    n, h, w = 2, 16, 16

    x = jax.random.normal(jax.random.fold_in(key, 123),
                          (n, in_channel, h, w), jnp.float32)
    params = init_params(in_channel, out_channel, kernel_size,
                         jax.random.fold_in(key, 7))

    out = var_estimate_forward(x, params)
    out = jax.block_until_ready(out)

    ref = _reference_forward(x, params)
    np.testing.assert_allclose(np.asarray(out), np.asarray(ref),
                               rtol=1e-4, atol=1e-4)
    print("KERNEL_OK")
</pallas_src>

<mosaic_0001>
module attributes {stable_mosaic.version = 11 : i64} {
  func.func @_fused_var_estimate_kernel(%arg0: i32, %arg1: memref<1x4x256xf32, #tpu.memory_space<vmem>>, %arg2: memref<4x36xf32, #tpu.memory_space<vmem>>, %arg3: memref<4x1xf32, #tpu.memory_space<vmem>>, %arg4: memref<4x36xf32, #tpu.memory_space<vmem>>, %arg5: memref<4x1xf32, #tpu.memory_space<vmem>>, %arg6: memref<4x36xf32, #tpu.memory_space<vmem>>, %arg7: memref<4x1xf32, #tpu.memory_space<vmem>>, %arg8: memref<1x4x256xf32, #tpu.memory_space<vmem>>, %arg9: memref<4x362xf32, #tpu.memory_space<vmem>>, %arg10: memref<36x324xf32, #tpu.memory_space<vmem>>) attributes {dimension_semantics = [#tpu.dimension_semantics<parallel>], iteration_bounds = array<i64: 2>, scalar_prefetch = 0 : i64, scratch_operands = 2 : i64, tpu.core_type = #tpu.core_type<tc>, window_params = [{transform_indices = @transform_0, window_bounds = array<i64: 1, 4, 256>}, {pipeline_mode = #tpu.pipeline_mode<synchronous>, transform_indices = @transform_1, window_bounds = array<i64: 4, 36>}, {pipeline_mode = #tpu.pipeline_mode<synchronous>, transform_indices = @transform_2, window_bounds = array<i64: 4, 1>}, {pipeline_mode = #tpu.pipeline_mode<synchronous>, transform_indices = @transform_3, window_bounds = array<i64: 4, 36>}, {pipeline_mode = #tpu.pipeline_mode<synchronous>, transform_indices = @transform_4, window_bounds = array<i64: 4, 1>}, {pipeline_mode = #tpu.pipeline_mode<synchronous>, transform_indices = @transform_5, window_bounds = array<i64: 4, 36>}, {pipeline_mode = #tpu.pipeline_mode<synchronous>, transform_indices = @transform_6, window_bounds = array<i64: 4, 1>}, {transform_indices = @transform_7, window_bounds = array<i64: 1, 4, 256>}]} {
    %cst = arith.constant 0.000000e+00 : f32
    %0 = vector.broadcast %cst : f32 to vector<4x362xf32>
    %c0 = arith.constant 0 : index
    %c0_0 = arith.constant 0 : index
    %1 = vector.load %arg9[%c0, %c0_0] : memref<4x362xf32, #tpu.memory_space<vmem>>, vector<4x362xf32>
    tpu.vector_store %arg9[%c0, %c0_0], %0 {strides = array<i32>} : memref<4x362xf32, #tpu.memory_space<vmem>>, vector<4x362xf32>,
    %c0_1 = arith.constant 0 : index
    %c0_2 = arith.constant 0 : index
    %c0_3 = arith.constant 0 : index
    %2 = vector.load %arg1[%c0_1, %c0_2, %c0_3] : memref<1x4x256xf32, #tpu.memory_space<vmem>>, vector<1x4x256xf32>
    %3 = vector.shape_cast %2 : vector<1x4x256xf32> to vector<4x256xf32>
    %4 = vector.extract_strided_slice %3 {offsets = [0, 0], sizes = [4, 16], strides = [1, 1]} : vector<4x256xf32> to vector<4x16xf32>
    %c0_4 = arith.constant 0 : index
    %c38 = arith.constant 38 : index
    %5 = vector.load %arg9[%c0_4, %c38] : memref<4x362xf32, #tpu.memory_space<vmem>>, vector<4x16xf32>
    tpu.vector_store %arg9[%c0_4, %c38], %4 {strides = array<i32>} : memref<4x362xf32, #tpu.memory_space<vmem>>, vector<4x16xf32>,
    %6 = vector.extract_strided_slice %3 {offsets = [0, 16], sizes = [4, 16], strides = [1, 1]} : vector<4x256xf32> to vector<4x16xf32>
    %c0_5 = arith.constant 0 : index
    %c56 = arith.constant 56 : index
    %7 = vector.load %arg9[%c0_5, %c56] : memref<4x362xf32, #tpu.memory_space<vmem>>, vector<4x16xf32>
    tpu.vector_store %arg9[%c0_5, %c56], %6 {strides = array<i32>} : memref<4x362xf32, #tpu.memory_space<vmem>>, vector<4x16xf32>,
    %8 = vector.extract_strided_slice %3 {offsets = [0, 32], sizes = [4, 16], strides = [1, 1]} : vector<4x256xf32> to vector<4x16xf32>
    %c0_6 = arith.constant 0 : index
    %c74 = arith.constant 74 : index
    %9 = vector.load %arg9[%c0_6, %c74] : memref<4x362xf32, #tpu.memory_space<vmem>>, vector<4x16xf32>
    tpu.vector_store %arg9[%c0_6, %c74], %8 {strides = array<i32>} : memref<4x362xf32, #tpu.memory_space<vmem>>, vector<4x16xf32>,
    %10 = vector.extract_strided_slice %3 {offsets = [0, 48], sizes = [4, 16], strides = [1, 1]} : vector<4x256xf32> to vector<4x16xf32>
    %c0_7 = arith.constant 0 : index
    %c92 = arith.constant 92 : index
    %11 = vector.load %arg9[%c0_7, %c92] : memref<4x362xf32, #tpu.memory_space<vmem>>, vector<4x16xf32>
    tpu.vector_store %arg9[%c0_7, %c92], %10 {strides = array<i32>} : memref<4x362xf32, #tpu.memory_space<vmem>>, vector<4x16xf32>,
    %12 = vector.extract_strided_slice %3 {offsets = [0, 64], sizes = [4, 16], strides = [1, 1]} : vector<4x256xf32> to vector<4x16xf32>
    %c0_8 = arith.constant 0 : index
    %c110 = arith.constant 110 : index
    %13 = vector.load %arg9[%c0_8, %c110] : memref<4x362xf32, #tpu.memory_space<vmem>>, vector<4x16xf32>
    tpu.vector_store %arg9[%c0_8, %c110], %12 {strides = array<i32>} : memref<4x362xf32, #tpu.memory_space<vmem>>, vector<4x16xf32>,
    %14 = vector.extract_strided_slice %3 {offsets = [0, 80], sizes = [4, 16], strides = [1, 1]} : vector<4x256xf32> to vector<4x16xf32>
    %c0_9 = arith.constant 0 : index
    %c128 = arith.constant 128 : index
    %15 = vector.load %arg9[%c0_9, %c128] : memref<4x362xf32, #tpu.memory_space<vmem>>, vector<4x16xf32>
    tpu.vector_store %arg9[%c0_9, %c128], %14 {strides = array<i32>} : memref<4x362xf32, #tpu.memory_space<vmem>>, vector<4x16xf32>,
    %16 = vector.extract_strided_slice %3 {offsets = [0, 96], sizes = [4, 16], strides = [1, 1]} : vector<4x256xf32> to vector<4x16xf32>
    %c0_10 = arith.constant 0 : index
    %c146 = arith.constant 146 : index
    %17 = vector.load %arg9[%c0_10, %c146] : memref<4x362xf32, #tpu.memory_space<vmem>>, vector<4x16xf32>
    tpu.vector_store %arg9[%c0_10, %c146], %16 {strides = array<i32>} : memref<4x362xf32, #tpu.memory_space<vmem>>, vector<4x16xf32>,
    %18 = vector.extract_strided_slice %3 {offsets = [0, 112], sizes = [4, 16], strides = [1, 1]} : vector<4x256xf32> to vector<4x16xf32>
    %c0_11 = arith.constant 0 : index
    %c164 = arith.constant 164 : index
    %19 = vector.load %arg9[%c0_11, %c164] : memref<4x362xf32, #tpu.memory_space<vmem>>, vector<4x16xf32>
    tpu.vector_store %arg9[%c0_11, %c164], %18 {strides = array<i32>} : memref<4x362xf32, #tpu.memory_space<vmem>>, vector<4x16xf32>,
    %20 = vector.extract_strided_slice %3 {offsets = [0, 128], sizes = [4, 16], strides = [1, 1]} : vector<4x256xf32> to vector<4x16xf32>
    %c0_12 = arith.constant 0 : index
    %c182 = arith.constant 182 : index
    %21 = vector.load %arg9[%c0_12, %c182] : memref<4x362xf32, #tpu.memory_space<vmem>>, vector<4x16xf32>
    tpu.vector_store %arg9[%c0_12, %c182], %20 {strides = array<i32>} : memref<4x362xf32, #tpu.memory_space<vmem>>, vector<4x16xf32>,
    %22 = vector.extract_strided_slice %3 {offsets = [0, 144], sizes = [4, 16], strides = [1, 1]} : vector<4x256xf32> to vector<4x16xf32>
    %c0_13 = arith.constant 0 : index
    %c200 = arith.constant 200 : index
    %23 = vector.load %arg9[%c0_13, %c200] : memref<4x362xf32, #tpu.memory_space<vmem>>, vector<4x16xf32>
    tpu.vector_store %arg9[%c0_13, %c200], %22 {strides = array<i32>} : memref<4x362xf32, #tpu.memory_space<vmem>>, vector<4x16xf32>,
    %24 = vector.extract_strided_slice %3 {offsets = [0, 160], sizes = [4, 16], strides = [1, 1]} : vector<4x256xf32> to vector<4x16xf32>
    %c0_14 = arith.constant 0 : index
    %c218 = arith.constant 218 : index
    %25 = vector.load %arg9[%c0_14, %c218] : memref<4x362xf32, #tpu.memory_space<vmem>>, vector<4x16xf32>
    tpu.vector_store %arg9[%c0_14, %c218], %24 {strides = array<i32>} : memref<4x362xf32, #tpu.memory_space<vmem>>, vector<4x16xf32>,
    %26 = vector.extract_strided_slice %3 {offsets = [0, 176], sizes = [4, 16], strides = [1, 1]} : vector<4x256xf32> to vector<4x16xf32>
    %c0_15 = arith.constant 0 : index
    %c236 = arith.constant 236 : index
    %27 = vector.load %arg9[%c0_15, %c236] : memref<4x362xf32, #tpu.memory_space<vmem>>, vector<4x16xf32>
    tpu.vector_store %arg9[%c0_15, %c236], %26 {strides = array<i32>} : memref<4x362xf32, #tpu.memory_space<vmem>>, vector<4x16xf32>,
    %28 = vector.extract_strided_slice %3 {offsets = [0, 192], sizes = [4, 16], strides = [1, 1]} : vector<4x256xf32> to vector<4x16xf32>
    %c0_16 = arith.constant 0 : index
    %c254 = arith.constant 254 : index
    %29 = vector.load %arg9[%c0_16, %c254] : memref<4x362xf32, #tpu.memory_space<vmem>>, vector<4x16xf32>
    tpu.vector_store %arg9[%c0_16, %c254], %28 {strides = array<i32>} : memref<4x362xf32, #tpu.memory_space<vmem>>, vector<4x16xf32>,
    %30 = vector.extract_strided_slice %3 {offsets = [0, 208], sizes = [4, 16], strides = [1, 1]} : vector<4x256xf32> to vector<4x16xf32>
    %c0_17 = arith.constant 0 : index
    %c272 = arith.constant 272 : index
    %31 = vector.load %arg9[%c0_17, %c272] : memref<4x362xf32, #tpu.memory_space<vmem>>, vector<4x16xf32>
    tpu.vector_store %arg9[%c0_17, %c272], %30 {strides = array<i32>} : memref<4x362xf32, #tpu.memory_space<vmem>>, vector<4x16xf32>,
    %32 = vector.extract_strided_slice %3 {offsets = [0, 224], sizes = [4, 16], strides = [1, 1]} : vector<4x256xf32> to vector<4x16xf32>
    %c0_18 = arith.constant 0 : index
    %c290 = arith.constant 290 : index
    %33 = vector.load %arg9[%c0_18, %c290] : memref<4x362xf32, #tpu.memory_space<vmem>>, vector<4x16xf32>
    tpu.vector_store %arg9[%c0_18, %c290], %32 {strides = array<i32>} : memref<4x362xf32, #tpu.memory_space<vmem>>, vector<4x16xf32>,
    %34 = vector.extract_strided_slice %3 {offsets = [0, 240], sizes = [4, 16], strides = [1, 1]} : vector<4x256xf32> to vector<4x16xf32>
    %c0_19 = arith.constant 0 : index
    %c308 = arith.constant 308 : index
    %35 = vector.load %arg9[%c0_19, %c308] : memref<4x362xf32, #tpu.memory_space<vmem>>, vector<4x16xf32>
    tpu.vector_store %arg9[%c0_19, %c308], %34 {strides = array<i32>} : memref<4x362xf32, #tpu.memory_space<vmem>>, vector<4x16xf32>,
    %c0_20 = arith.constant 0 : index
    %c0_21 = arith.constant 0 : index
    %36 = vector.load %arg9[%c0_20, %c0_21] : memref<4x362xf32, #tpu.memory_space<vmem>>, vector<4x324xf32>
    %c0_22 = arith.constant 0 : index
    %c0_23 = arith.constant 0 : index
    %37 = vector.load %arg10[%c0_22, %c0_23] : memref<36x324xf32, #tpu.memory_space<vmem>>, vector<4x324xf32>
    tpu.vector_store %arg10[%c0_22, %c0_23], %36 {strides = array<i32>} : memref<36x324xf32, #tpu.memory_space<vmem>>, vector<4x324xf32>,
    %c0_24 = arith.constant 0 : index
    %c1 = arith.constant 1 : index
    %38 = vector.load %arg9[%c0_24, %c1] : memref<4x362xf32, #tpu.memory_space<vmem>>, vector<4x324xf32>
    %c4 = arith.constant 4 : index
    %c0_25 = arith.constant 0 : index
    %39 = vector.load %arg10[%c4, %c0_25] : memref<36x324xf32, #tpu.memory_space<vmem>>, vector<4x324xf32>
    tpu.vector_store %arg10[%c4, %c0_25], %38 {strides = array<i32>} : memref<36x324xf32, #tpu.memory_space<vmem>>, vector<4x324xf32>,
    %c0_26 = arith.constant 0 : index
    %c2 = arith.constant 2 : index
    %40 = vector.load %arg9[%c0_26, %c2] : memref<4x362xf32, #tpu.memory_space<vmem>>, vector<4x324xf32>
    %c8 = arith.constant 8 : index
    %c0_27 = arith.constant 0 : index
    %41 = vector.load %arg10[%c8, %c0_27] : memref<36x324xf32, #tpu.memory_space<vmem>>, vector<4x324xf32>
    tpu.vector_store %arg10[%c8, %c0_27], %40 {strides = array<i32>} : memref<36x324xf32, #tpu.memory_space<vmem>>, vector<4x324xf32>,
    %c0_28 = arith.constant 0 : index
    %c18 = arith.constant 18 : index
    %42 = vector.load %arg9[%c0_28, %c18] : memref<4x362xf32, #tpu.memory_space<vmem>>, vector<4x324xf32>
    %c12 = arith.constant 12 : index
    %c0_29 = arith.constant 0 : index
    %43 = vector.load %arg10[%c12, %c0_29] : memref<36x324xf32, #tpu.memory_space<vmem>>, vector<4x324xf32>
    tpu.vector_store %arg10[%c12, %c0_29], %42 {strides = array<i32>} : memref<36x324xf32, #tpu.memory_space<vmem>>, vector<4x324xf32>,
    %c0_30 = arith.constant 0 : index
    %c19 = arith.constant 19 : index
    %44 = vector.load %arg9[%c0_30, %c19] : memref<4x362xf32, #tpu.memory_space<vmem>>, vector<4x324xf32>
    %c16 = arith.constant 16 : index
    %c0_31 = arith.constant 0 : index
    %45 = vector.load %arg10[%c16, %c0_31] : memref<36x324xf32, #tpu.memory_space<vmem>>, vector<4x324xf32>
    tpu.vector_store %arg10[%c16, %c0_31], %44 {strides = array<i32>} : memref<36x324xf32, #tpu.memory_space<vmem>>, vector<4x324xf32>,
    %c0_32 = arith.constant 0 : index
    %c20 = arith.constant 20 : index
    %46 = vector.load %arg9[%c0_32, %c20] : memref<4x362xf32, #tpu.memory_space<vmem>>, vector<4x324xf32>
    %c20_33 = arith.constant 20 : index
    %c0_34 = arith.constant 0 : index
    %47 = vector.load %arg10[%c20_33, %c0_34] : memref<36x324xf32, #tpu.memory_space<vmem>>, vector<4x324xf32>
    tpu.vector_store %arg10[%c20_33, %c0_34], %46 {strides = array<i32>} : memref<36x324xf32, #tpu.memory_space<vmem>>, vector<4x324xf32>,
    %c0_35 = arith.constant 0 : index
    %c36 = arith.constant 36 : index
    %48 = vector.load %arg9[%c0_35, %c36] : memref<4x362xf32, #tpu.memory_space<vmem>>, vector<4x324xf32>
    %c24 = arith.constant 24 : index
    %c0_36 = arith.constant 0 : index
    %49 = vector.load %arg10[%c24, %c0_36] : memref<36x324xf32, #tpu.memory_space<vmem>>, vector<4x324xf32>
    tpu.vector_store %arg10[%c24, %c0_36], %48 {strides = array<i32>} : memref<36x324xf32, #tpu.memory_space<vmem>>, vector<4x324xf32>,
    %c0_37 = arith.constant 0 : index
    %c37 = arith.constant 37 : index
    %50 = vector.load %arg9[%c0_37, %c37] : memref<4x362xf32, #tpu.memory_space<vmem>>, vector<4x324xf32>
    %c28 = arith.constant 28 : index
    %c0_38 = arith.constant 0 : index
    %51 = vector.load %arg10[%c28, %c0_38] : memref<36x324xf32, #tpu.memory_space<vmem>>, vector<4x324xf32>
    tpu.vector_store %arg10[%c28, %c0_38], %50 {strides = array<i32>} : memref<36x324xf32, #tpu.memory_space<vmem>>, vector<4x324xf32>,
    %c0_39 = arith.constant 0 : index
    %c38_40 = arith.constant 38 : index
    %52 = vector.load %arg9[%c0_39, %c38_40] : memref<4x362xf32, #tpu.memory_space<vmem>>, vector<4x324xf32>
    %c32 = arith.constant 32 : index
    %c0_41 = arith.constant 0 : index
    %53 = vector.load %arg10[%c32, %c0_41] : memref<36x324xf32, #tpu.memory_space<vmem>>, vector<4x324xf32>
    tpu.vector_store %arg10[%c32, %c0_41], %52 {strides = array<i32>} : memref<36x324xf32, #tpu.memory_space<vmem>>, vector<4x324xf32>,
    %c0_42 = arith.constant 0 : index
    %c0_43 = arith.constant 0 : index
    %54 = vector.load %arg2[%c0_42, %c0_43] : memref<4x36xf32, #tpu.memory_space<vmem>>, vector<4x36xf32>
    %c0_44 = arith.constant 0 : index
    %c0_45 = arith.constant 0 : index
    %55 = vector.load %arg10[%c0_44, %c0_45] : memref<36x324xf32, #tpu.memory_space<vmem>>, vector<36x324xf32>
    %cst_46 = arith.constant dense<0.000000e+00> : vector<4x324xf32>
    %56 = tpu.matmul %54, %55, %cst_46 {dimension_numbers = #tpu.dot_dimension_numbers<[1], [0], [0], [1], [0, 0, 1, 1], [], []>} : vector<4x36xf32>, vector<36x324xf32>, vector<4x324xf32> -> vector<4x324xf32>
    %c0_47 = arith.constant 0 : index
    %c0_48 = arith.constant 0 : index
    %57 = vector.load %arg3[%c0_47, %c0_48] : memref<4x1xf32, #tpu.memory_space<vmem>>, vector<4x1xf32>
    %58 = vector.broadcast %57 : vector<4x1xf32> to vector<4x324xf32>
    %59 = arith.addf %56, %58 : vector<4x324xf32>
    %cst_49 = arith.constant 0.000000e+00 : f32
    %60 = vector.broadcast %cst_49 : f32 to vector<4x324xf32>
    %61 = arith.cmpf ogt, %59, %60 : vector<4x324xf32>
    %cst_50 = arith.constant 0.000000e+00 : f32
    %62 = vector.broadcast %cst_50 : f32 to vector<4x324xf32>
    %63 = arith.minimumf %59, %62 : vector<4x324xf32>
    %64 = math.exp %63 : vector<4x324xf32>
    %cst_51 = arith.constant 1.000000e+00 : f32
    %65 = vector.broadcast %cst_51 : f32 to vector<4x324xf32>
    %66 = arith.subf %64, %65 : vector<4x324xf32>
    %67 = arith.select %61, %59, %66 : vector<4x324xi1>, vector<4x324xf32>
    %68 = vector.extract_strided_slice %67 {offsets = [0, 19], sizes = [4, 16], strides = [1, 1]} : vector<4x324xf32> to vector<4x16xf32>
    %c0_52 = arith.constant 0 : index
    %c38_53 = arith.constant 38 : index
    %69 = vector.load %arg9[%c0_52, %c38_53] : memref<4x362xf32, #tpu.memory_space<vmem>>, vector<4x16xf32>
    tpu.vector_store %arg9[%c0_52, %c38_53], %68 {strides = array<i32>} : memref<4x362xf32, #tpu.memory_space<vmem>>, vector<4x16xf32>,
    %70 = vector.extract_strided_slice %67 {offsets = [0, 37], sizes = [4, 16], strides = [1, 1]} : vector<4x324xf32> to vector<4x16xf32>
    %c0_54 = arith.constant 0 : index
    %c56_55 = arith.constant 56 : index
    %71 = vector.load %arg9[%c0_54, %c56_55] : memref<4x362xf32, #tpu.memory_space<vmem>>, vector<4x16xf32>
    tpu.vector_store %arg9[%c0_54, %c56_55], %70 {strides = array<i32>} : memref<4x362xf32, #tpu.memory_space<vmem>>, vector<4x16xf32>,
    %72 = vector.extract_strided_slice %67 {offsets = [0, 55], sizes = [4, 16], strides = [1, 1]} : vector<4x324xf32> to vector<4x16xf32>
    %c0_56 = arith.constant 0 : index
    %c74_57 = arith.constant 74 : index
    %73 = vector.load %arg9[%c0_56, %c74_57] : memref<4x362xf32, #tpu.memory_space<vmem>>, vector<4x16xf32>
    tpu.vector_store %arg9[%c0_56, %c74_57], %72 {strides = array<i32>} : memref<4x362xf32, #tpu.memory_space<vmem>>, vector<4x16xf32>,
    %74 = vector.extract_strided_slice %67 {offsets = [0, 73], sizes = [4, 16], strides = [1, 1]} : vector<4x324xf32> to vector<4x16xf32>
    %c0_58 = arith.constant 0 : index
    %c92_59 = arith.constant 92 : index
    %75 = vector.load %arg9[%c0_58, %c92_59] : memref<4x362xf32, #tpu.memory_space<vmem>>, vector<4x16xf32>
    tpu.vector_store %arg9[%c0_58, %c92_59], %74 {strides = array<i32>} : memref<4x362xf32, #tpu.memory_space<vmem>>, vector<4x16xf32>,
    %76 = vector.extract_strided_slice %67 {offsets = [0, 91], sizes = [4, 16], strides = [1, 1]} : vector<4x324xf32> to vector<4x16xf32>
    %c0_60 = arith.constant 0 : index
    %c110_61 = arith.constant 110 : index
    %77 = vector.load %arg9[%c0_60, %c110_61] : memref<4x362xf32, #tpu.memory_space<vmem>>, vector<4x16xf32>
    tpu.vector_store %arg9[%c0_60, %c110_61], %76 {strides = array<i32>} : memref<4x362xf32, #tpu.memory_space<vmem>>, vector<4x16xf32>,
    %78 = vector.extract_strided_slice %67 {offsets = [0, 109], sizes = [4, 16], strides = [1, 1]} : vector<4x324xf32> to vector<4x16xf32>
    %c0_62 = arith.constant 0 : index
    %c128_63 = arith.constant 128 : index
    %79 = vector.load %arg9[%c0_62, %c128_63] : memref<4x362xf32, #tpu.memory_space<vmem>>, vector<4x16xf32>
    tpu.vector_store %arg9[%c0_62, %c128_63], %78 {strides = array<i32>} : memref<4x362xf32, #tpu.memory_space<vmem>>, vector<4x16xf32>,
    %80 = vector.extract_strided_slice %67 {offsets = [0, 127], sizes = [4, 16], strides = [1, 1]} : vector<4x324xf32> to vector<4x16xf32>
    %c0_64 = arith.constant 0 : index
    %c146_65 = arith.constant 146 : index
    %81 = vector.load %arg9[%c0_64, %c146_65] : memref<4x362xf32, #tpu.memory_space<vmem>>, vector<4x16xf32>
    tpu.vector_store %arg9[%c0_64, %c146_65], %80 {strides = array<i32>} : memref<4x362xf32, #tpu.memory_space<vmem>>, vector<4x16xf32>,
    %82 = vector.extract_strided_slice %67 {offsets = [0, 145], sizes = [4, 16], strides = [1, 1]} : vector<4x324xf32> to vector<4x16xf32>
    %c0_66 = arith.constant 0 : index
    %c164_67 = arith.constant 164 : index
    %83 = vector.load %arg9[%c0_66, %c164_67] : memref<4x362xf32, #tpu.memory_space<vmem>>, vector<4x16xf32>
    tpu.vector_store %arg9[%c0_66, %c164_67], %82 {strides = array<i32>} : memref<4x362xf32, #tpu.memory_space<vmem>>, vector<4x16xf32>,
    %84 = vector.extract_strided_slice %67 {offsets = [0, 163], sizes = [4, 16], strides = [1, 1]} : vector<4x324xf32> to vector<4x16xf32>
    %c0_68 = arith.constant 0 : index
    %c182_69 = arith.constant 182 : index
    %85 = vector.load %arg9[%c0_68, %c182_69] : memref<4x362xf32, #tpu.memory_space<vmem>>, vector<4x16xf32>
    tpu.vector_store %arg9[%c0_68, %c182_69], %84 {strides = array<i32>} : memref<4x362xf32, #tpu.memory_space<vmem>>, vector<4x16xf32>,
    %86 = vector.extract_strided_slice %67 {offsets = [0, 181], sizes = [4, 16], strides = [1, 1]} : vector<4x324xf32> to vector<4x16xf32>
    %c0_70 = arith.constant 0 : index
    %c200_71 = arith.constant 200 : index
    %87 = vector.load %arg9[%c0_70, %c200_71] : memref<4x362xf32, #tpu.memory_space<vmem>>, vector<4x16xf32>
    tpu.vector_store %arg9[%c0_70, %c200_71], %86 {strides = array<i32>} : memref<4x362xf32, #tpu.memory_space<vmem>>, vector<4x16xf32>,
    %88 = vector.extract_strided_slice %67 {offsets = [0, 199], sizes = [4, 16], strides = [1, 1]} : vector<4x324xf32> to vector<4x16xf32>
    %c0_72 = arith.constant 0 : index
    %c218_73 = arith.constant 218 : index
    %89 = vector.load %arg9[%c0_72, %c218_73] : memref<4x362xf32, #tpu.memory_space<vmem>>, vector<4x16xf32>
    tpu.vector_store %arg9[%c0_72, %c218_73], %88 {strides = array<i32>} : memref<4x362xf32, #tpu.memory_space<vmem>>, vector<4x16xf32>,
    %90 = vector.extract_strided_slice %67 {offsets = [0, 217], sizes = [4, 16], strides = [1, 1]} : vector<4x324xf32> to vector<4x16xf32>
    %c0_74 = arith.constant 0 : index
    %c236_75 = arith.constant 236 : index
    %91 = vector.load %arg9[%c0_74, %c236_75] : memref<4x362xf32, #tpu.memory_space<vmem>>, vector<4x16xf32>
    tpu.vector_store %arg9[%c0_74, %c236_75], %90 {strides = array<i32>} : memref<4x362xf32, #tpu.memory_space<vmem>>, vector<4x16xf32>,
    %92 = vector.extract_strided_slice %67 {offsets = [0, 235], sizes = [4, 16], strides = [1, 1]} : vector<4x324xf32> to vector<4x16xf32>
    %c0_76 = arith.constant 0 : index
    %c254_77 = arith.constant 254 : index
    %93 = vector.load %arg9[%c0_76, %c254_77] : memref<4x362xf32, #tpu.memory_space<vmem>>, vector<4x16xf32>
    tpu.vector_store %arg9[%c0_76, %c254_77], %92 {strides = array<i32>} : memref<4x362xf32, #tpu.memory_space<vmem>>, vector<4x16xf32>,
    %94 = vector.extract_strided_slice %67 {offsets = [0, 253], sizes = [4, 16], strides = [1, 1]} : vector<4x324xf32> to vector<4x16xf32>
    %c0_78 = arith.constant 0 : index
    %c272_79 = arith.constant 272 : index
    %95 = vector.load %arg9[%c0_78, %c272_79] : memref<4x362xf32, #tpu.memory_space<vmem>>, vector<4x16xf32>
    tpu.vector_store %arg9[%c0_78, %c272_79], %94 {strides = array<i32>} : memref<4x362xf32, #tpu.memory_space<vmem>>, vector<4x16xf32>,
    %96 = vector.extract_strided_slice %67 {offsets = [0, 271], sizes = [4, 16], strides = [1, 1]} : vector<4x324xf32> to vector<4x16xf32>
    %c0_80 = arith.constant 0 : index
    %c290_81 = arith.constant 290 : index
    %97 = vector.load %arg9[%c0_80, %c290_81] : memref<4x362xf32, #tpu.memory_space<vmem>>, vector<4x16xf32>
    tpu.vector_store %arg9[%c0_80, %c290_81], %96 {strides = array<i32>} : memref<4x362xf32, #tpu.memory_space<vmem>>, vector<4x16xf32>,
    %98 = vector.extract_strided_slice %67 {offsets = [0, 289], sizes = [4, 16], strides = [1, 1]} : vector<4x324xf32> to vector<4x16xf32>
    %c0_82 = arith.constant 0 : index
    %c308_83 = arith.constant 308 : index
    %99 = vector.load %arg9[%c0_82, %c308_83] : memref<4x362xf32, #tpu.memory_space<vmem>>, vector<4x16xf32>
    tpu.vector_store %arg9[%c0_82, %c308_83], %98 {strides = array<i32>} : memref<4x362xf32, #tpu.memory_space<vmem>>, vector<4x16xf32>,
    %c0_84 = arith.constant 0 : index
    %c0_85 = arith.constant 0 : index
    %100 = vector.load %arg9[%c0_84, %c0_85] : memref<4x362xf32, #tpu.memory_space<vmem>>, vector<4x324xf32>
    %c0_86 = arith.constant 0 : index
    %c0_87 = arith.constant 0 : index
    %101 = vector.load %arg10[%c0_86, %c0_87] : memref<36x324xf32, #tpu.memory_space<vmem>>, vector<4x324xf32>
    tpu.vector_store %arg10[%c0_86, %c0_87], %100 {strides = array<i32>} : memref<36x324xf32, #tpu.memory_space<vmem>>, vector<4x324xf32>,
    %c0_88 = arith.constant 0 : index
    %c1_89 = arith.constant 1 : index
    %102 = vector.load %arg9[%c0_88, %c1_89] : memref<4x362xf32, #tpu.memory_space<vmem>>, vector<4x324xf32>
    %c4_90 = arith.constant 4 : index
    %c0_91 = arith.constant 0 : index
    %103 = vector.load %arg10[%c4_90, %c0_91] : memref<36x324xf32, #tpu.memory_space<vmem>>, vector<4x324xf32>
    tpu.vector_store %arg10[%c4_90, %c0_91], %102 {strides = array<i32>} : memref<36x324xf32, #tpu.memory_space<vmem>>, vector<4x324xf32>,
    %c0_92 = arith.constant 0 : index
    %c2_93 = arith.constant 2 : index
    %104 = vector.load %arg9[%c0_92, %c2_93] : memref<4x362xf32, #tpu.memory_space<vmem>>, vector<4x324xf32>
    %c8_94 = arith.constant 8 : index
    %c0_95 = arith.constant 0 : index
    %105 = vector.load %arg10[%c8_94, %c0_95] : memref<36x324xf32, #tpu.memory_space<vmem>>, vector<4x324xf32>
    tpu.vector_store %arg10[%c8_94, %c0_95], %104 {strides = array<i32>} : memref<36x324xf32, #tpu.memory_space<vmem>>, vector<4x324xf32>,
    %c0_96 = arith.constant 0 : index
    %c18_97 = arith.constant 18 : index
    %106 = vector.load %arg9[%c0_96, %c18_97] : memref<4x362xf32, #tpu.memory_space<vmem>>, vector<4x324xf32>
    %c12_98 = arith.constant 12 : index
    %c0_99 = arith.constant 0 : index
    %107 = vector.load %arg10[%c12_98, %c0_99] : memref<36x324xf32, #tpu.memory_space<vmem>>, vector<4x324xf32>
    tpu.vector_store %arg10[%c12_98, %c0_99], %106 {strides = array<i32>} : memref<36x324xf32, #tpu.memory_space<vmem>>, vector<4x324xf32>,
    %c0_100 = arith.constant 0 : index
    %c19_101 = arith.constant 19 : index
    %108 = vector.load %arg9[%c0_100, %c19_101] : memref<4x362xf32, #tpu.memory_space<vmem>>, vector<4x324xf32>
    %c16_102 = arith.constant 16 : index
    %c0_103 = arith.constant 0 : index
    %109 = vector.load %arg10[%c16_102, %c0_103] : memref<36x324xf32, #tpu.memory_space<vmem>>, vector<4x324xf32>
    tpu.vector_store %arg10[%c16_102, %c0_103], %108 {strides = array<i32>} : memref<36x324xf32, #tpu.memory_space<vmem>>, vector<4x324xf32>,
    %c0_104 = arith.constant 0 : index
    %c20_105 = arith.constant 20 : index
    %110 = vector.load %arg9[%c0_104, %c20_105] : memref<4x362xf32, #tpu.memory_space<vmem>>, vector<4x324xf32>
    %c20_106 = arith.constant 20 : index
    %c0_107 = arith.constant 0 : index
    %111 = vector.load %arg10[%c20_106, %c0_107] : memref<36x324xf32, #tpu.memory_space<vmem>>, vector<4x324xf32>
    tpu.vector_store %arg10[%c20_106, %c0_107], %110 {strides = array<i32>} : memref<36x324xf32, #tpu.memory_space<vmem>>, vector<4x324xf32>,
    %c0_108 = arith.constant 0 : index
    %c36_109 = arith.constant 36 : index
    %112 = vector.load %arg9[%c0_108, %c36_109] : memref<4x362xf32, #tpu.memory_space<vmem>>, vector<4x324xf32>
    %c24_110 = arith.constant 24 : index
    %c0_111 = arith.constant 0 : index
    %113 = vector.load %arg10[%c24_110, %c0_111] : memref<36x324xf32, #tpu.memory_space<vmem>>, vector<4x324xf32>
    tpu.vector_store %arg10[%c24_110, %c0_111], %112 {strides = array<i32>} : memref<36x324xf32, #tpu.memory_space<vmem>>, vector<4x324xf32>,
    %c0_112 = arith.constant 0 : index
    %c37_113 = arith.constant 37 : index
    %114 = vector.load %arg9[%c0_112, %c37_113] : memref<4x362xf32, #tpu.memory_space<vmem>>, vector<4x324xf32>
    %c28_114 = arith.constant 28 : index
    %c0_115 = arith.constant 0 : index
    %115 = vector.load %arg10[%c28_114, %c0_115] : memref<36x324xf32, #tpu.memory_space<vmem>>, vector<4x324xf32>
    tpu.vector_store %arg10[%c28_114, %c0_115], %114 {strides = array<i32>} : memref<36x324xf32, #tpu.memory_space<vmem>>, vector<4x324xf32>,
    %c0_116 = arith.constant 0 : index
    %c38_117 = arith.constant 38 : index
    %116 = vector.load %arg9[%c0_116, %c38_117] : memref<4x362xf32, #tpu.memory_space<vmem>>, vector<4x324xf32>
    %c32_118 = arith.constant 32 : index
    %c0_119 = arith.constant 0 : index
    %117 = vector.load %arg10[%c32_118, %c0_119] : memref<36x324xf32, #tpu.memory_space<vmem>>, vector<4x324xf32>
    tpu.vector_store %arg10[%c32_118, %c0_119], %116 {strides = array<i32>} : memref<36x324xf32, #tpu.memory_space<vmem>>, vector<4x324xf32>,
    %c0_120 = arith.constant 0 : index
    %c0_121 = arith.constant 0 : index
    %118 = vector.load %arg4[%c0_120, %c0_121] : memref<4x36xf32, #tpu.memory_space<vmem>>, vector<4x36xf32>
    %c0_122 = arith.constant 0 : index
    %c0_123 = arith.constant 0 : index
    %119 = vector.load %arg10[%c0_122, %c0_123] : memref<36x324xf32, #tpu.memory_space<vmem>>, vector<36x324xf32>
    %cst_124 = arith.constant dense<0.000000e+00> : vector<4x324xf32>
    %120 = tpu.matmul %118, %119, %cst_124 {dimension_numbers = #tpu.dot_dimension_numbers<[1], [0], [0], [1], [0, 0, 1, 1], [], []>} : vector<4x36xf32>, vector<36x324xf32>, vector<4x324xf32> -> vector<4x324xf32>
    %c0_125 = arith.constant 0 : index
    %c0_126 = arith.constant 0 : index
    %121 = vector.load %arg5[%c0_125, %c0_126] : memref<4x1xf32, #tpu.memory_space<vmem>>, vector<4x1xf32>
    %122 = vector.broadcast %121 : vector<4x1xf32> to vector<4x324xf32>
    %123 = arith.addf %120, %122 : vector<4x324xf32>
    %cst_127 = arith.constant 0.000000e+00 : f32
    %124 = vector.broadcast %cst_127 : f32 to vector<4x324xf32>
    %125 = arith.cmpf ogt, %123, %124 : vector<4x324xf32>
    %cst_128 = arith.constant 0.000000e+00 : f32
    %126 = vector.broadcast %cst_128 : f32 to vector<4x324xf32>
    %127 = arith.minimumf %123, %126 : vector<4x324xf32>
    %128 = math.exp %127 : vector<4x324xf32>
    %cst_129 = arith.constant 1.000000e+00 : f32
    %129 = vector.broadcast %cst_129 : f32 to vector<4x324xf32>
    %130 = arith.subf %128, %129 : vector<4x324xf32>
    %131 = arith.select %125, %123, %130 : vector<4x324xi1>, vector<4x324xf32>
    %132 = vector.extract_strided_slice %131 {offsets = [0, 19], sizes = [4, 16], strides = [1, 1]} : vector<4x324xf32> to vector<4x16xf32>
    %c0_130 = arith.constant 0 : index
    %c38_131 = arith.constant 38 : index
    %133 = vector.load %arg9[%c0_130, %c38_131] : memref<4x362xf32, #tpu.memory_space<vmem>>, vector<4x16xf32>
    tpu.vector_store %arg9[%c0_130, %c38_131], %132 {strides = array<i32>} : memref<4x362xf32, #tpu.memory_space<vmem>>, vector<4x16xf32>,
    %134 = vector.extract_strided_slice %131 {offsets = [0, 37], sizes = [4, 16], strides = [1, 1]} : vector<4x324xf32> to vector<4x16xf32>
    %c0_132 = arith.constant 0 : index
    %c56_133 = arith.constant 56 : index
    %135 = vector.load %arg9[%c0_132, %c56_133] : memref<4x362xf32, #tpu.memory_space<vmem>>, vector<4x16xf32>
    tpu.vector_store %arg9[%c0_132, %c56_133], %134 {strides = array<i32>} : memref<4x362xf32, #tpu.memory_space<vmem>>, vector<4x16xf32>,
    %136 = vector.extract_strided_slice %131 {offsets = [0, 55], sizes = [4, 16], strides = [1, 1]} : vector<4x324xf32> to vector<4x16xf32>
    %c0_134 = arith.constant 0 : index
    %c74_135 = arith.constant 74 : index
    %137 = vector.load %arg9[%c0_134, %c74_135] : memref<4x362xf32, #tpu.memory_space<vmem>>, vector<4x16xf32>
    tpu.vector_store %arg9[%c0_134, %c74_135], %136 {strides = array<i32>} : memref<4x362xf32, #tpu.memory_space<vmem>>, vector<4x16xf32>,
    %138 = vector.extract_strided_slice %131 {offsets = [0, 73], sizes = [4, 16], strides = [1, 1]} : vector<4x324xf32> to vector<4x16xf32>
    %c0_136 = arith.constant 0 : index
    %c92_137 = arith.constant 92 : index
    %139 = vector.load %arg9[%c0_136, %c92_137] : memref<4x362xf32, #tpu.memory_space<vmem>>, vector<4x16xf32>
    tpu.vector_store %arg9[%c0_136, %c92_137], %138 {strides = array<i32>} : memref<4x362xf32, #tpu.memory_space<vmem>>, vector<4x16xf32>,
    %140 = vector.extract_strided_slice %131 {offsets = [0, 91], sizes = [4, 16], strides = [1, 1]} : vector<4x324xf32> to vector<4x16xf32>
    %c0_138 = arith.constant 0 : index
    %c110_139 = arith.constant 110 : index
    %141 = vector.load %arg9[%c0_138, %c110_139] : memref<4x362xf32, #tpu.memory_space<vmem>>, vector<4x16xf32>
    tpu.vector_store %arg9[%c0_138, %c110_139], %140 {strides = array<i32>} : memref<4x362xf32, #tpu.memory_space<vmem>>, vector<4x16xf32>,
    %142 = vector.extract_strided_slice %131 {offsets = [0, 109], sizes = [4, 16], strides = [1, 1]} : vector<4x324xf32> to vector<4x16xf32>
    %c0_140 = arith.constant 0 : index
    %c128_141 = arith.constant 128 : index
    %143 = vector.load %arg9[%c0_140, %c128_141] : memref<4x362xf32, #tpu.memory_space<vmem>>, vector<4x16xf32>
    tpu.vector_store %arg9[%c0_140, %c128_141], %142 {strides = array<i32>} : memref<4x362xf32, #tpu.memory_space<vmem>>, vector<4x16xf32>,
    %144 = vector.extract_strided_slice %131 {offsets = [0, 127], sizes = [4, 16], strides = [1, 1]} : vector<4x324xf32> to vector<4x16xf32>
    %c0_142 = arith.constant 0 : index
    %c146_143 = arith.constant 146 : index
    %145 = vector.load %arg9[%c0_142, %c146_143] : memref<4x362xf32, #tpu.memory_space<vmem>>, vector<4x16xf32>
    tpu.vector_store %arg9[%c0_142, %c146_143], %144 {strides = array<i32>} : memref<4x362xf32, #tpu.memory_space<vmem>>, vector<4x16xf32>,
    %146 = vector.extract_strided_slice %131 {offsets = [0, 145], sizes = [4, 16], strides = [1, 1]} : vector<4x324xf32> to vector<4x16xf32>
    %c0_144 = arith.constant 0 : index
    %c164_145 = arith.constant 164 : index
    %147 = vector.load %arg9[%c0_144, %c164_145] : memref<4x362xf32, #tpu.memory_space<vmem>>, vector<4x16xf32>
    tpu.vector_store %arg9[%c0_144, %c164_145], %146 {strides = array<i32>} : memref<4x362xf32, #tpu.memory_space<vmem>>, vector<4x16xf32>,
    %148 = vector.extract_strided_slice %131 {offsets = [0, 163], sizes = [4, 16], strides = [1, 1]} : vector<4x324xf32> to vector<4x16xf32>
    %c0_146 = arith.constant 0 : index
    %c182_147 = arith.constant 182 : index
    %149 = vector.load %arg9[%c0_146, %c182_147] : memref<4x362xf32, #tpu.memory_space<vmem>>, vector<4x16xf32>
    tpu.vector_store %arg9[%c0_146, %c182_147], %148 {strides = array<i32>} : memref<4x362xf32, #tpu.memory_space<vmem>>, vector<4x16xf32>,
    %150 = vector.extract_strided_slice %131 {offsets = [0, 181], sizes = [4, 16], strides = [1, 1]} : vector<4x324xf32> to vector<4x16xf32>
    %c0_148 = arith.constant 0 : index
    %c200_149 = arith.constant 200 : index
    %151 = vector.load %arg9[%c0_148, %c200_149] : memref<4x362xf32, #tpu.memory_space<vmem>>, vector<4x16xf32>
    tpu.vector_store %arg9[%c0_148, %c200_149], %150 {strides = array<i32>} : memref<4x362xf32, #tpu.memory_space<vmem>>, vector<4x16xf32>,
    %152 = vector.extract_strided_slice %131 {offsets = [0, 199], sizes = [4, 16], strides = [1, 1]} : vector<4x324xf32> to vector<4x16xf32>
    %c0_150 = arith.constant 0 : index
    %c218_151 = arith.constant 218 : index
    %153 = vector.load %arg9[%c0_150, %c218_151] : memref<4x362xf32, #tpu.memory_space<vmem>>, vector<4x16xf32>
    tpu.vector_store %arg9[%c0_150, %c218_151], %152 {strides = array<i32>} : memref<4x362xf32, #tpu.memory_space<vmem>>, vector<4x16xf32>,
    %154 = vector.extract_strided_slice %131 {offsets = [0, 217], sizes = [4, 16], strides = [1, 1]} : vector<4x324xf32> to vector<4x16xf32>
    %c0_152 = arith.constant 0 : index
    %c236_153 = arith.constant 236 : index
    %155 = vector.load %arg9[%c0_152, %c236_153] : memref<4x362xf32, #tpu.memory_space<vmem>>, vector<4x16xf32>
    tpu.vector_store %arg9[%c0_152, %c236_153], %154 {strides = array<i32>} : memref<4x362xf32, #tpu.memory_space<vmem>>, vector<4x16xf32>,
    %156 = vector.extract_strided_slice %131 {offsets = [0, 235], sizes = [4, 16], strides = [1, 1]} : vector<4x324xf32> to vector<4x16xf32>
    %c0_154 = arith.constant 0 : index
    %c254_155 = arith.constant 254 : index
    %157 = vector.load %arg9[%c0_154, %c254_155] : memref<4x362xf32, #tpu.memory_space<vmem>>, vector<4x16xf32>
    tpu.vector_store %arg9[%c0_154, %c254_155], %156 {strides = array<i32>} : memref<4x362xf32, #tpu.memory_space<vmem>>, vector<4x16xf32>,
    %158 = vector.extract_strided_slice %131 {offsets = [0, 253], sizes = [4, 16], strides = [1, 1]} : vector<4x324xf32> to vector<4x16xf32>
    %c0_156 = arith.constant 0 : index
    %c272_157 = arith.constant 272 : index
    %159 = vector.load %arg9[%c0_156, %c272_157] : memref<4x362xf32, #tpu.memory_space<vmem>>, vector<4x16xf32>
    tpu.vector_store %arg9[%c0_156, %c272_157], %158 {strides = array<i32>} : memref<4x362xf32, #tpu.memory_space<vmem>>, vector<4x16xf32>,
    %160 = vector.extract_strided_slice %131 {offsets = [0, 271], sizes = [4, 16], strides = [1, 1]} : vector<4x324xf32> to vector<4x16xf32>
    %c0_158 = arith.constant 0 : index
    %c290_159 = arith.constant 290 : index
    %161 = vector.load %arg9[%c0_158, %c290_159] : memref<4x362xf32, #tpu.memory_space<vmem>>, vector<4x16xf32>
    tpu.vector_store %arg9[%c0_158, %c290_159], %160 {strides = array<i32>} : memref<4x362xf32, #tpu.memory_space<vmem>>, vector<4x16xf32>,
    %162 = vector.extract_strided_slice %131 {offsets = [0, 289], sizes = [4, 16], strides = [1, 1]} : vector<4x324xf32> to vector<4x16xf32>
    %c0_160 = arith.constant 0 : index
    %c308_161 = arith.constant 308 : index
    %163 = vector.load %arg9[%c0_160, %c308_161] : memref<4x362xf32, #tpu.memory_space<vmem>>, vector<4x16xf32>
    tpu.vector_store %arg9[%c0_160, %c308_161], %162 {strides = array<i32>} : memref<4x362xf32, #tpu.memory_space<vmem>>, vector<4x16xf32>,
    %c0_162 = arith.constant 0 : index
    %c0_163 = arith.constant 0 : index
    %164 = vector.load %arg9[%c0_162, %c0_163] : memref<4x362xf32, #tpu.memory_space<vmem>>, vector<4x324xf32>
    %c0_164 = arith.constant 0 : index
    %c0_165 = arith.constant 0 : index
    %165 = vector.load %arg10[%c0_164, %c0_165] : memref<36x324xf32, #tpu.memory_space<vmem>>, vector<4x324xf32>
    tpu.vector_store %arg10[%c0_164, %c0_165], %164 {strides = array<i32>} : memref<36x324xf32, #tpu.memory_space<vmem>>, vector<4x324xf32>,
    %c0_166 = arith.constant 0 : index
    %c1_167 = arith.constant 1 : index
    %166 = vector.load %arg9[%c0_166, %c1_167] : memref<4x362xf32, #tpu.memory_space<vmem>>, vector<4x324xf32>
    %c4_168 = arith.constant 4 : index
    %c0_169 = arith.constant 0 : index
    %167 = vector.load %arg10[%c4_168, %c0_169] : memref<36x324xf32, #tpu.memory_space<vmem>>, vector<4x324xf32>
    tpu.vector_store %arg10[%c4_168, %c0_169], %166 {strides = array<i32>} : memref<36x324xf32, #tpu.memory_space<vmem>>, vector<4x324xf32>,
    %c0_170 = arith.constant 0 : index
    %c2_171 = arith.constant 2 : index
    %168 = vector.load %arg9[%c0_170, %c2_171] : memref<4x362xf32, #tpu.memory_space<vmem>>, vector<4x324xf32>
    %c8_172 = arith.constant 8 : index
    %c0_173 = arith.constant 0 : index
    %169 = vector.load %arg10[%c8_172, %c0_173] : memref<36x324xf32, #tpu.memory_space<vmem>>, vector<4x324xf32>
    tpu.vector_store %arg10[%c8_172, %c0_173], %168 {strides = array<i32>} : memref<36x324xf32, #tpu.memory_space<vmem>>, vector<4x324xf32>,
    %c0_174 = arith.constant 0 : index
    %c18_175 = arith.constant 18 : index
    %170 = vector.load %arg9[%c0_174, %c18_175] : memref<4x362xf32, #tpu.memory_space<vmem>>, vector<4x324xf32>
    %c12_176 = arith.constant 12 : index
    %c0_177 = arith.constant 0 : index
    %171 = vector.load %arg10[%c12_176, %c0_177] : memref<36x324xf32, #tpu.memory_space<vmem>>, vector<4x324xf32>
    tpu.vector_store %arg10[%c12_176, %c0_177], %170 {strides = array<i32>} : memref<36x324xf32, #tpu.memory_space<vmem>>, vector<4x324xf32>,
    %c0_178 = arith.constant 0 : index
    %c19_179 = arith.constant 19 : index
    %172 = vector.load %arg9[%c0_178, %c19_179] : memref<4x362xf32, #tpu.memory_space<vmem>>, vector<4x324xf32>
    %c16_180 = arith.constant 16 : index
    %c0_181 = arith.constant 0 : index
    %173 = vector.load %arg10[%c16_180, %c0_181] : memref<36x324xf32, #tpu.memory_space<vmem>>, vector<4x324xf32>
    tpu.vector_store %arg10[%c16_180, %c0_181], %172 {strides = array<i32>} : memref<36x324xf32, #tpu.memory_space<vmem>>, vector<4x324xf32>,
    %c0_182 = arith.constant 0 : index
    %c20_183 = arith.constant 20 : index
    %174 = vector.load %arg9[%c0_182, %c20_183] : memref<4x362xf32, #tpu.memory_space<vmem>>, vector<4x324xf32>
    %c20_184 = arith.constant 20 : index
    %c0_185 = arith.constant 0 : index
    %175 = vector.load %arg10[%c20_184, %c0_185] : memref<36x324xf32, #tpu.memory_space<vmem>>, vector<4x324xf32>
    tpu.vector_store %arg10[%c20_184, %c0_185], %174 {strides = array<i32>} : memref<36x324xf32, #tpu.memory_space<vmem>>, vector<4x324xf32>,
    %c0_186 = arith.constant 0 : index
    %c36_187 = arith.constant 36 : index
    %176 = vector.load %arg9[%c0_186, %c36_187] : memref<4x362xf32, #tpu.memory_space<vmem>>, vector<4x324xf32>
    %c24_188 = arith.constant 24 : index
    %c0_189 = arith.constant 0 : index
    %177 = vector.load %arg10[%c24_188, %c0_189] : memref<36x324xf32, #tpu.memory_space<vmem>>, vector<4x324xf32>
    tpu.vector_store %arg10[%c24_188, %c0_189], %176 {strides = array<i32>} : memref<36x324xf32, #tpu.memory_space<vmem>>, vector<4x324xf32>,
    %c0_190 = arith.constant 0 : index
    %c37_191 = arith.constant 37 : index
    %178 = vector.load %arg9[%c0_190, %c37_191] : memref<4x362xf32, #tpu.memory_space<vmem>>, vector<4x324xf32>
    %c28_192 = arith.constant 28 : index
    %c0_193 = arith.constant 0 : index
    %179 = vector.load %arg10[%c28_192, %c0_193] : memref<36x324xf32, #tpu.memory_space<vmem>>, vector<4x324xf32>
    tpu.vector_store %arg10[%c28_192, %c0_193], %178 {strides = array<i32>} : memref<36x324xf32, #tpu.memory_space<vmem>>, vector<4x324xf32>,
    %c0_194 = arith.constant 0 : index
    %c38_195 = arith.constant 38 : index
    %180 = vector.load %arg9[%c0_194, %c38_195] : memref<4x362xf32, #tpu.memory_space<vmem>>, vector<4x324xf32>
    %c32_196 = arith.constant 32 : index
    %c0_197 = arith.constant 0 : index
    %181 = vector.load %arg10[%c32_196, %c0_197] : memref<36x324xf32, #tpu.memory_space<vmem>>, vector<4x324xf32>
    tpu.vector_store %arg10[%c32_196, %c0_197], %180 {strides = array<i32>} : memref<36x324xf32, #tpu.memory_space<vmem>>, vector<4x324xf32>,
    %c0_198 = arith.constant 0 : index
    %c0_199 = arith.constant 0 : index
    %182 = vector.load %arg6[%c0_198, %c0_199] : memref<4x36xf32, #tpu.memory_space<vmem>>, vector<4x36xf32>
    %c0_200 = arith.constant 0 : index
    %c0_201 = arith.constant 0 : index
    %183 = vector.load %arg10[%c0_200, %c0_201] : memref<36x324xf32, #tpu.memory_space<vmem>>, vector<36x324xf32>
    %cst_202 = arith.constant dense<0.000000e+00> : vector<4x324xf32>
    %184 = tpu.matmul %182, %183, %cst_202 {dimension_numbers = #tpu.dot_dimension_numbers<[1], [0], [0], [1], [0, 0, 1, 1], [], []>} : vector<4x36xf32>, vector<36x324xf32>, vector<4x324xf32> -> vector<4x324xf32>
    %c0_203 = arith.constant 0 : index
    %c0_204 = arith.constant 0 : index
    %185 = vector.load %arg7[%c0_203, %c0_204] : memref<4x1xf32, #tpu.memory_space<vmem>>, vector<4x1xf32>
    %186 = vector.broadcast %185 : vector<4x1xf32> to vector<4x324xf32>
    %187 = arith.addf %184, %186 : vector<4x324xf32>
    %cst_205 = arith.constant 0.000000e+00 : f32
    %188 = vector.broadcast %cst_205 : f32 to vector<4x324xf32>
    %189 = arith.cmpf ogt, %187, %188 : vector<4x324xf32>
    %cst_206 = arith.constant 0.000000e+00 : f32
    %190 = vector.broadcast %cst_206 : f32 to vector<4x324xf32>
    %191 = arith.minimumf %187, %190 : vector<4x324xf32>
    %192 = math.exp %191 : vector<4x324xf32>
    %cst_207 = arith.constant 1.000000e+00 : f32
    %193 = vector.broadcast %cst_207 : f32 to vector<4x324xf32>
    %194 = arith.subf %192, %193 : vector<4x324xf32>
    %195 = arith.select %189, %187, %194 : vector<4x324xi1>, vector<4x324xf32>
    %196 = vector.extract_strided_slice %195 {offsets = [0, 19], sizes = [4, 16], strides = [1, 1]} : vector<4x324xf32> to vector<4x16xf32>
    %c0_208 = arith.constant 0 : index
    %c0_209 = arith.constant 0 : index
    %c0_210 = arith.constant 0 : index
    %197 = vector.load %arg8[%c0_208, %c0_209, %c0_210] : memref<1x4x256xf32, #tpu.memory_space<vmem>>, vector<1x4x16xf32>
    %198 = vector.shape_cast %197 : vector<1x4x16xf32> to vector<4x16xf32>
    %199 = vector.shape_cast %196 : vector<4x16xf32> to vector<1x4x16xf32>
    tpu.vector_store %arg8[%c0_208, %c0_209, %c0_210], %199 {strides = array<i32>} : memref<1x4x256xf32, #tpu.memory_space<vmem>>, vector<1x4x16xf32>,
    %200 = vector.extract_strided_slice %195 {offsets = [0, 37], sizes = [4, 16], strides = [1, 1]} : vector<4x324xf32> to vector<4x16xf32>
    %c0_211 = arith.constant 0 : index
    %c0_212 = arith.constant 0 : index
    %c16_213 = arith.constant 16 : index
    %201 = vector.load %arg8[%c0_211, %c0_212, %c16_213] : memref<1x4x256xf32, #tpu.memory_space<vmem>>, vector<1x4x16xf32>
    %202 = vector.shape_cast %201 : vector<1x4x16xf32> to vector<4x16xf32>
    %203 = vector.shape_cast %200 : vector<4x16xf32> to vector<1x4x16xf32>
    tpu.vector_store %arg8[%c0_211, %c0_212, %c16_213], %203 {strides = array<i32>} : memref<1x4x256xf32, #tpu.memory_space<vmem>>, vector<1x4x16xf32>,
    %204 = vector.extract_strided_slice %195 {offsets = [0, 55], sizes = [4, 16], strides = [1, 1]} : vector<4x324xf32> to vector<4x16xf32>
    %c0_214 = arith.constant 0 : index
    %c0_215 = arith.constant 0 : index
    %c32_216 = arith.constant 32 : index
    %205 = vector.load %arg8[%c0_214, %c0_215, %c32_216] : memref<1x4x256xf32, #tpu.memory_space<vmem>>, vector<1x4x16xf32>
    %206 = vector.shape_cast %205 : vector<1x4x16xf32> to vector<4x16xf32>
    %207 = vector.shape_cast %204 : vector<4x16xf32> to vector<1x4x16xf32>
    tpu.vector_store %arg8[%c0_214, %c0_215, %c32_216], %207 {strides = array<i32>} : memref<1x4x256xf32, #tpu.memory_space<vmem>>, vector<1x4x16xf32>,
    %208 = vector.extract_strided_slice %195 {offsets = [0, 73], sizes = [4, 16], strides = [1, 1]} : vector<4x324xf32> to vector<4x16xf32>
    %c0_217 = arith.constant 0 : index
    %c0_218 = arith.constant 0 : index
    %c48 = arith.constant 48 : index
    %209 = vector.load %arg8[%c0_217, %c0_218, %c48] : memref<1x4x256xf32, #tpu.memory_space<vmem>>, vector<1x4x16xf32>
    %210 = vector.shape_cast %209 : vector<1x4x16xf32> to vector<4x16xf32>
    %211 = vector.shape_cast %208 : vector<4x16xf32> to vector<1x4x16xf32>
    tpu.vector_store %arg8[%c0_217, %c0_218, %c48], %211 {strides = array<i32>} : memref<1x4x256xf32, #tpu.memory_space<vmem>>, vector<1x4x16xf32>,
    %212 = vector.extract_strided_slice %195 {offsets = [0, 91], sizes = [4, 16], strides = [1, 1]} : vector<4x324xf32> to vector<4x16xf32>
    %c0_219 = arith.constant 0 : index
    %c0_220 = arith.constant 0 : index
    %c64 = arith.constant 64 : index
    %213 = vector.load %arg8[%c0_219, %c0_220, %c64] : memref<1x4x256xf32, #tpu.memory_space<vmem>>, vector<1x4x16xf32>
    %214 = vector.shape_cast %213 : vector<1x4x16xf32> to vector<4x16xf32>
    %215 = vector.shape_cast %212 : vector<4x16xf32> to vector<1x4x16xf32>
    tpu.vector_store %arg8[%c0_219, %c0_220, %c64], %215 {strides = array<i32>} : memref<1x4x256xf32, #tpu.memory_space<vmem>>, vector<1x4x16xf32>,
    %216 = vector.extract_strided_slice %195 {offsets = [0, 109], sizes = [4, 16], strides = [1, 1]} : vector<4x324xf32> to vector<4x16xf32>
    %c0_221 = arith.constant 0 : index
    %c0_222 = arith.constant 0 : index
    %c80 = arith.constant 80 : index
    %217 = vector.load %arg8[%c0_221, %c0_222, %c80] : memref<1x4x256xf32, #tpu.memory_space<vmem>>, vector<1x4x16xf32>
    %218 = vector.shape_cast %217 : vector<1x4x16xf32> to vector<4x16xf32>
    %219 = vector.shape_cast %216 : vector<4x16xf32> to vector<1x4x16xf32>
    tpu.vector_store %arg8[%c0_221, %c0_222, %c80], %219 {strides = array<i32>} : memref<1x4x256xf32, #tpu.memory_space<vmem>>, vector<1x4x16xf32>,
    %220 = vector.extract_strided_slice %195 {offsets = [0, 127], sizes = [4, 16], strides = [1, 1]} : vector<4x324xf32> to vector<4x16xf32>
    %c0_223 = arith.constant 0 : index
    %c0_224 = arith.constant 0 : index
    %c96 = arith.constant 96 : index
    %221 = vector.load %arg8[%c0_223, %c0_224, %c96] : memref<1x4x256xf32, #tpu.memory_space<vmem>>, vector<1x4x16xf32>
    %222 = vector.shape_cast %221 : vector<1x4x16xf32> to vector<4x16xf32>
    %223 = vector.shape_cast %220 : vector<4x16xf32> to vector<1x4x16xf32>
    tpu.vector_store %arg8[%c0_223, %c0_224, %c96], %223 {strides = array<i32>} : memref<1x4x256xf32, #tpu.memory_space<vmem>>, vector<1x4x16xf32>,
    %224 = vector.extract_strided_slice %195 {offsets = [0, 145], sizes = [4, 16], strides = [1, 1]} : vector<4x324xf32> to vector<4x16xf32>
    %c0_225 = arith.constant 0 : index
    %c0_226 = arith.constant 0 : index
    %c112 = arith.constant 112 : index
    %225 = vector.load %arg8[%c0_225, %c0_226, %c112] : memref<1x4x256xf32, #tpu.memory_space<vmem>>, vector<1x4x16xf32>
    %226 = vector.shape_cast %225 : vector<1x4x16xf32> to vector<4x16xf32>
    %227 = vector.shape_cast %224 : vector<4x16xf32> to vector<1x4x16xf32>
    tpu.vector_store %arg8[%c0_225, %c0_226, %c112], %227 {strides = array<i32>} : memref<1x4x256xf32, #tpu.memory_space<vmem>>, vector<1x4x16xf32>,
    %228 = vector.extract_strided_slice %195 {offsets = [0, 163], sizes = [4, 16], strides = [1, 1]} : vector<4x324xf32> to vector<4x16xf32>
    %c0_227 = arith.constant 0 : index
    %c0_228 = arith.constant 0 : index
    %c128_229 = arith.constant 128 : index
    %229 = vector.load %arg8[%c0_227, %c0_228, %c128_229] : memref<1x4x256xf32, #tpu.memory_space<vmem>>, vector<1x4x16xf32>
    %230 = vector.shape_cast %229 : vector<1x4x16xf32> to vector<4x16xf32>
    %231 = vector.shape_cast %228 : vector<4x16xf32> to vector<1x4x16xf32>
    tpu.vector_store %arg8[%c0_227, %c0_228, %c128_229], %231 {strides = array<i32>} : memref<1x4x256xf32, #tpu.memory_space<vmem>>, vector<1x4x16xf32>,
    %232 = vector.extract_strided_slice %195 {offsets = [0, 181], sizes = [4, 16], strides = [1, 1]} : vector<4x324xf32> to vector<4x16xf32>
    %c0_230 = arith.constant 0 : index
    %c0_231 = arith.constant 0 : index
    %c144 = arith.constant 144 : index
    %233 = vector.load %arg8[%c0_230, %c0_231, %c144] : memref<1x4x256xf32, #tpu.memory_space<vmem>>, vector<1x4x16xf32>
    %234 = vector.shape_cast %233 : vector<1x4x16xf32> to vector<4x16xf32>
    %235 = vector.shape_cast %232 : vector<4x16xf32> to vector<1x4x16xf32>
    tpu.vector_store %arg8[%c0_230, %c0_231, %c144], %235 {strides = array<i32>} : memref<1x4x256xf32, #tpu.memory_space<vmem>>, vector<1x4x16xf32>,
    %236 = vector.extract_strided_slice %195 {offsets = [0, 199], sizes = [4, 16], strides = [1, 1]} : vector<4x324xf32> to vector<4x16xf32>
    %c0_232 = arith.constant 0 : index
    %c0_233 = arith.constant 0 : index
    %c160 = arith.constant 160 : index
    %237 = vector.load %arg8[%c0_232, %c0_233, %c160] : memref<1x4x256xf32, #tpu.memory_space<vmem>>, vector<1x4x16xf32>
    %238 = vector.shape_cast %237 : vector<1x4x16xf32> to vector<4x16xf32>
    %239 = vector.shape_cast %236 : vector<4x16xf32> to vector<1x4x16xf32>
    tpu.vector_store %arg8[%c0_232, %c0_233, %c160], %239 {strides = array<i32>} : memref<1x4x256xf32, #tpu.memory_space<vmem>>, vector<1x4x16xf32>,
    %240 = vector.extract_strided_slice %195 {offsets = [0, 217], sizes = [4, 16], strides = [1, 1]} : vector<4x324xf32> to vector<4x16xf32>
    %c0_234 = arith.constant 0 : index
    %c0_235 = arith.constant 0 : index
    %c176 = arith.constant 176 : index
    %241 = vector.load %arg8[%c0_234, %c0_235, %c176] : memref<1x4x256xf32, #tpu.memory_space<vmem>>, vector<1x4x16xf32>
    %242 = vector.shape_cast %241 : vector<1x4x16xf32> to vector<4x16xf32>
    %243 = vector.shape_cast %240 : vector<4x16xf32> to vector<1x4x16xf32>
    tpu.vector_store %arg8[%c0_234, %c0_235, %c176], %243 {strides = array<i32>} : memref<1x4x256xf32, #tpu.memory_space<vmem>>, vector<1x4x16xf32>,
    %244 = vector.extract_strided_slice %195 {offsets = [0, 235], sizes = [4, 16], strides = [1, 1]} : vector<4x324xf32> to vector<4x16xf32>
    %c0_236 = arith.constant 0 : index
    %c0_237 = arith.constant 0 : index
    %c192 = arith.constant 192 : index
    %245 = vector.load %arg8[%c0_236, %c0_237, %c192] : memref<1x4x256xf32, #tpu.memory_space<vmem>>, vector<1x4x16xf32>
    %246 = vector.shape_cast %245 : vector<1x4x16xf32> to vector<4x16xf32>
    %247 = vector.shape_cast %244 : vector<4x16xf32> to vector<1x4x16xf32>
    tpu.vector_store %arg8[%c0_236, %c0_237, %c192], %247 {strides = array<i32>} : memref<1x4x256xf32, #tpu.memory_space<vmem>>, vector<1x4x16xf32>,
    %248 = vector.extract_strided_slice %195 {offsets = [0, 253], sizes = [4, 16], strides = [1, 1]} : vector<4x324xf32> to vector<4x16xf32>
    %c0_238 = arith.constant 0 : index
    %c0_239 = arith.constant 0 : index
    %c208 = arith.constant 208 : index
    %249 = vector.load %arg8[%c0_238, %c0_239, %c208] : memref<1x4x256xf32, #tpu.memory_space<vmem>>, vector<1x4x16xf32>
    %250 = vector.shape_cast %249 : vector<1x4x16xf32> to vector<4x16xf32>
    %251 = vector.shape_cast %248 : vector<4x16xf32> to vector<1x4x16xf32>
    tpu.vector_store %arg8[%c0_238, %c0_239, %c208], %251 {strides = array<i32>} : memref<1x4x256xf32, #tpu.memory_space<vmem>>, vector<1x4x16xf32>,
    %252 = vector.extract_strided_slice %195 {offsets = [0, 271], sizes = [4, 16], strides = [1, 1]} : vector<4x324xf32> to vector<4x16xf32>
    %c0_240 = arith.constant 0 : index
    %c0_241 = arith.constant 0 : index
    %c224 = arith.constant 224 : index
    %253 = vector.load %arg8[%c0_240, %c0_241, %c224] : memref<1x4x256xf32, #tpu.memory_space<vmem>>, vector<1x4x16xf32>
    %254 = vector.shape_cast %253 : vector<1x4x16xf32> to vector<4x16xf32>
    %255 = vector.shape_cast %252 : vector<4x16xf32> to vector<1x4x16xf32>
    tpu.vector_store %arg8[%c0_240, %c0_241, %c224], %255 {strides = array<i32>} : memref<1x4x256xf32, #tpu.memory_space<vmem>>, vector<1x4x16xf32>,
    %256 = vector.extract_strided_slice %195 {offsets = [0, 289], sizes = [4, 16], strides = [1, 1]} : vector<4x324xf32> to vector<4x16xf32>
    %c0_242 = arith.constant 0 : index
    %c0_243 = arith.constant 0 : index
    %c240 = arith.constant 240 : index
    %257 = vector.load %arg8[%c0_242, %c0_243, %c240] : memref<1x4x256xf32, #tpu.memory_space<vmem>>, vector<1x4x16xf32>
    %258 = vector.shape_cast %257 : vector<1x4x16xf32> to vector<4x16xf32>
    %259 = vector.shape_cast %256 : vector<4x16xf32> to vector<1x4x16xf32>
    tpu.vector_store %arg8[%c0_242, %c0_243, %c240], %259 {strides = array<i32>} : memref<1x4x256xf32, #tpu.memory_space<vmem>>, vector<1x4x16xf32>,
    return
  }
  func.func @transform_0(%arg0: i32) -> (i32, i32, i32) {
    %c0_i32 = arith.constant 0 : i32
    %c0_i32_0 = arith.constant 0 : i32
    %c0_i32_1 = arith.constant 0 : i32
    return %arg0, %c0_i32, %c0_i32_0 : i32, i32, i32
  }
  func.func @transform_1(%arg0: i32) -> (i32, i32) {
    %c0_i32 = arith.constant 0 : i32
    %c0_i32_0 = arith.constant 0 : i32
    %c0_i32_1 = arith.constant 0 : i32
    return %c0_i32, %c0_i32_0 : i32, i32
  }
  func.func @transform_2(%arg0: i32) -> (i32, i32) {
    %c0_i32 = arith.constant 0 : i32
    %c0_i32_0 = arith.constant 0 : i32
    %c0_i32_1 = arith.constant 0 : i32
    return %c0_i32, %c0_i32_0 : i32, i32
  }
  func.func @transform_3(%arg0: i32) -> (i32, i32) {
    %c0_i32 = arith.constant 0 : i32
    %c0_i32_0 = arith.constant 0 : i32
    %c0_i32_1 = arith.constant 0 : i32
    return %c0_i32, %c0_i32_0 : i32, i32
  }
  func.func @transform_4(%arg0: i32) -> (i32, i32) {
    %c0_i32 = arith.constant 0 : i32
    %c0_i32_0 = arith.constant 0 : i32
    %c0_i32_1 = arith.constant 0 : i32
    return %c0_i32, %c0_i32_0 : i32, i32
  }
  func.func @transform_5(%arg0: i32) -> (i32, i32) {
    %c0_i32 = arith.constant 0 : i32
    %c0_i32_0 = arith.constant 0 : i32
    %c0_i32_1 = arith.constant 0 : i32
    return %c0_i32, %c0_i32_0 : i32, i32
  }
  func.func @transform_6(%arg0: i32) -> (i32, i32) {
    %c0_i32 = arith.constant 0 : i32
    %c0_i32_0 = arith.constant 0 : i32
    %c0_i32_1 = arith.constant 0 : i32
    return %c0_i32, %c0_i32_0 : i32, i32
  }
  func.func @transform_7(%arg0: i32) -> (i32, i32, i32) {
    %c0_i32 = arith.constant 0 : i32
    %c0_i32_0 = arith.constant 0 : i32
    %c0_i32_1 = arith.constant 0 : i32
    return %arg0, %c0_i32, %c0_i32_0 : i32, i32, i32
  }
}

</mosaic_0001>

<llo_original>
// kernel: tpu_custom_call.1
$region0: #{tpu_custom_call.1}
  #allocation0 [shape = 'u32[]', space=smem, size = 0x4, offset = 0x4, fixed_abs, tag = 'smem constant byte address 0x4 - core index']
  #allocation1 [shape = 'u32[144,128]{1,0:T(1,128)}', space=vmem, size = 0x12000, scoped, tag = 'internal scratch']
  #allocation2 [shape = 'f32[4,362]{1,0:T(4,128)}', space=vmem, size = 0x1800, scoped, tag = 'scratch operand']
  #allocation3 [shape = 'f32[36,324]{1,0:T(8,128)}', space=vmem, size = 0xf000, scoped, tag = 'scratch operand']
  %s0 = inlined_call_operand.hbm [shape: f32[2,4,256], index: 0, kind: input, shape index: {}]
  %s1 = inlined_call_operand.vmem [shape: f32[4,36], index: 1, kind: input, shape index: {}]
  %s2 = inlined_call_operand.vmem [shape: f32[4,1], index: 2, kind: input, shape index: {}]
  %s3 = inlined_call_operand.vmem [shape: f32[4,36], index: 3, kind: input, shape index: {}]
  %s4 = inlined_call_operand.vmem [shape: f32[4,1], index: 4, kind: input, shape index: {}]
  %s5 = inlined_call_operand.vmem [shape: f32[4,36], index: 5, kind: input, shape index: {}]
  %s6 = inlined_call_operand.vmem [shape: f32[4,1], index: 6, kind: input, shape index: {}]
  %s7 = inlined_call_operand.hbm [shape: f32[2,4,256], index: 7, kind: output, shape index: {}]
  %s8 = sld [smem:[#allocation0]]
  $region65: #{tpu_custom_call.1} parent=0
    _
  %s10 = ssub.s32 1, %s8
  %s11 = scalar_select 0, %s10, %s8
  $region1: #{tpu_custom_call.1} parent=0
    #allocation4 [shape = 'u8[8192]{0}', space=vmem, size = 0x2000, scoped, tag = 'input window, operand 0']
    #allocation5 [shape = 's32[2]{0}', space=sflag, size = 0x8, scoped, tag = 'scoped memory for tpu_custom_call.1']
    #allocation6 [shape = 's32[2]{0}', space=sflag, size = 0x8, scoped, tag = 'scoped memory for tpu_custom_call.1']
    #allocation7 [shape = 'u8[8192]{0}', space=vmem, size = 0x2000, scoped, tag = 'output window, operand 0']
    %12 = vsyncpa [#allocation5], 0
    %s13 = scalar_lea.sflag [#allocation5], 1
    %14 = vsyncpa %s13, 0
    %15 = vsyncpa [#allocation6], 0
    %s16 = scalar_lea.sflag [#allocation6], 1
    %17 = vsyncpa %s16, 0
    loop: start=0, step=1, limit=4
    $region2: #{tpu_custom_call.1} parent=1 // loop_pre_header
      _
    $region3: #{tpu_custom_call.1} parent=1 // loop_header
      %s19 = sphi 0, %s23
      %p20 = scmp.ge.s32.totalorder %s19, 4
      %s29 = sphi 0, %s31
      %s32 = sphi 0, %s29
      %s33 = sphi 0, %s32
      %s49 = sphi 0, %s33
      %s53 = sphi 0, %s53
      %s55 = sphi 0, %s53
      %s56 = sphi 0, %s55
      %s70 = sphi 0, %s56
      %s74 = sphi 0, %s74
      %s76 = sphi 0, %s74
      %s77 = sphi 0, %s76
      %s91 = sphi 0, %s77
      %s95 = sphi 0, %s95
      %s97 = sphi 0, %s95
      %s98 = sphi 0, %s97
      %s112 = sphi 0, %s98
      %s116 = sphi 0, %s116
      %s118 = sphi 0, %s116
      %s119 = sphi 0, %s118
      %s133 = sphi 0, %s119
      %s137 = sphi 0, %s137
      %s139 = sphi 0, %s137
      %s140 = sphi 0, %s139
      %s154 = sphi 0, %s140
      %s158 = sphi 0, %s158
      %s160 = sphi 0, %s158
      %s161 = sphi 0, %s160
      %s175 = sphi 0, %s161
      %s181 = sphi 0, %s183
      %s184 = sphi 0, %s181
      %s185 = sphi 0, %s184
      %s201 = sphi 0, %s185
    $region4: #{tpu_custom_call.1} parent=1 // loop_header_branch
      %22 = sbr.rel (%p20) target = $region8
    $region5: #{tpu_custom_call.1} parent=1 // loop_body
      %s24 = ssub.s32 %s19, 1
      %s25 = ssub.s32 %s19, 2
      %s26 = sadd.s32 %s19, 1
      %s27 = ssub.s32 %s19, %s26
      %p28 = scmp.eq.s32.totalorder %s27, 0
      %s30 = sadd.s32 %s29, 1
      %s31 = scalar_select %p28, %s29, %s30
      %p34 = pneg %p28
      %p35 = scmp.eq.s32.totalorder %s19, 1
      %p36 = por %p34, %p35
      %p37 = scmp.ne.s32.totalorder %s29, %s32
      %p38 = scmp.eq.s32.totalorder %s19, 0
      %p39 = por %p37, %p38
      %p40 = scmp.ne.s32.totalorder %s29, %s32
      %p41 = scmp.eq.s32.totalorder %s24, 1
      %p42 = por %p40, %p41
      %p43 = scmp.ne.s32.totalorder %s32, %s33
      %p44 = scmp.eq.s32.totalorder %s24, 0
      %p45 = por %p43, %p44
      %p46 = scmp.ne.s32.totalorder %s32, %s33
      %p47 = scmp.eq.s32.totalorder %s25, 1
      %p48 = por %p46, %p47
      %p50 = scmp.ne.s32.totalorder %s33, %s49
      %p51 = scmp.eq.s32.totalorder %s25, 0
      %p52 = por %p50, %p51
      %s54 = sadd.s32 %s53, 1
      %p57 = scmp.eq.s32.totalorder %s19, 1
      %p58 = scmp.ne.s32.totalorder %s53, %s55
      %p59 = scmp.eq.s32.totalorder %s19, 0
      %p60 = por %p58, %p59
      %p61 = scmp.ne.s32.totalorder %s53, %s55
      %p62 = scmp.eq.s32.totalorder %s24, 1
      %p63 = por %p61, %p62
      %p64 = scmp.ne.s32.totalorder %s55, %s56
      %p65 = scmp.eq.s32.totalorder %s24, 0
      %p66 = por %p64, %p65
      %p67 = scmp.ne.s32.totalorder %s55, %s56
      %p68 = scmp.eq.s32.totalorder %s25, 1
      %p69 = por %p67, %p68
      %p71 = scmp.ne.s32.totalorder %s56, %s70
      %p72 = scmp.eq.s32.totalorder %s25, 0
      %p73 = por %p71, %p72
      %s75 = sadd.s32 %s74, 1
      %p78 = scmp.eq.s32.totalorder %s19, 1
      %p79 = scmp.ne.s32.totalorder %s74, %s76
      %p80 = scmp.eq.s32.totalorder %s19, 0
      %p81 = por %p79, %p80
      %p82 = scmp.ne.s32.totalorder %s74, %s76
      %p83 = scmp.eq.s32.totalorder %s24, 1
      %p84 = por %p82, %p83
      %p85 = scmp.ne.s32.totalorder %s76, %s77
      %p86 = scmp.eq.s32.totalorder %s24, 0
      %p87 = por %p85, %p86
      %p88 = scmp.ne.s32.totalorder %s76, %s77
      %p89 = scmp.eq.s32.totalorder %s25, 1
      %p90 = por %p88, %p89
      %p92 = scmp.ne.s32.totalorder %s77, %s91
      %p93 = scmp.eq.s32.totalorder %s25, 0
      %p94 = por %p92, %p93
      %s96 = sadd.s32 %s95, 1
      %p99 = scmp.eq.s32.totalorder %s19, 1
      %p100 = scmp.ne.s32.totalorder %s95, %s97
      %p101 = scmp.eq.s32.totalorder %s19, 0
      %p102 = por %p100, %p101
      %p103 = scmp.ne.s32.totalorder %s95, %s97
      %p104 = scmp.eq.s32.totalorder %s24, 1
      %p105 = por %p103, %p104
      %p106 = scmp.ne.s32.totalorder %s97, %s98
      %p107 = scmp.eq.s32.totalorder %s24, 0
      %p108 = por %p106, %p107
      %p109 = scmp.ne.s32.totalorder %s97, %s98
      %p110 = scmp.eq.s32.totalorder %s25, 1
      %p111 = por %p109, %p110
      %p113 = scmp.ne.s32.totalorder %s98, %s112
      %p114 = scmp.eq.s32.totalorder %s25, 0
      %p115 = por %p113, %p114
      %s117 = sadd.s32 %s116, 1
      %p120 = scmp.eq.s32.totalorder %s19, 1
      %p121 = scmp.ne.s32.totalorder %s116, %s118
      %p122 = scmp.eq.s32.totalorder %s19, 0
      %p123 = por %p121, %p122
      %p124 = scmp.ne.s32.totalorder %s116, %s118
      %p125 = scmp.eq.s32.totalorder %s24, 1
      %p126 = por %p124, %p125
      %p127 = scmp.ne.s32.totalorder %s118, %s119
      %p128 = scmp.eq.s32.totalorder %s24, 0
      %p129 = por %p127, %p128
      %p130 = scmp.ne.s32.totalorder %s118, %s119
      %p131 = scmp.eq.s32.totalorder %s25, 1
      %p132 = por %p130, %p131
      %p134 = scmp.ne.s32.totalorder %s119, %s133
      %p135 = scmp.eq.s32.totalorder %s25, 0
      %p136 = por %p134, %p135
      %s138 = sadd.s32 %s137, 1
      %p141 = scmp.eq.s32.totalorder %s19, 1
      %p142 = scmp.ne.s32.totalorder %s137, %s139
      %p143 = scmp.eq.s32.totalorder %s19, 0
      %p144 = por %p142, %p143
      %p145 = scmp.ne.s32.totalorder %s137, %s139
      %p146 = scmp.eq.s32.totalorder %s24, 1
      %p147 = por %p145, %p146
      %p148 = scmp.ne.s32.totalorder %s139, %s140
      %p149 = scmp.eq.s32.totalorder %s24, 0
      %p150 = por %p148, %p149
      %p151 = scmp.ne.s32.totalorder %s139, %s140
      %p152 = scmp.eq.s32.totalorder %s25, 1
      %p153 = por %p151, %p152
      %p155 = scmp.ne.s32.totalorder %s140, %s154
      %p156 = scmp.eq.s32.totalorder %s25, 0
      %p157 = por %p155, %p156
      %s159 = sadd.s32 %s158, 1
      %p162 = scmp.eq.s32.totalorder %s19, 1
      %p163 = scmp.ne.s32.totalorder %s158, %s160
      %p164 = scmp.eq.s32.totalorder %s19, 0
      %p165 = por %p163, %p164
      %p166 = scmp.ne.s32.totalorder %s158, %s160
      %p167 = scmp.eq.s32.totalorder %s24, 1
      %p168 = por %p166, %p167
      %p169 = scmp.ne.s32.totalorder %s160, %s161
      %p170 = scmp.eq.s32.totalorder %s24, 0
      %p171 = por %p169, %p170
      %p172 = scmp.ne.s32.totalorder %s160, %s161
      %p173 = scmp.eq.s32.totalorder %s25, 1
      %p174 = por %p172, %p173
      %p176 = scmp.ne.s32.totalorder %s161, %s175
      %p177 = scmp.eq.s32.totalorder %s25, 0
      %p178 = por %p176, %p177
      %s179 = ssub.s32 %s19, %s26
      %p180 = scmp.eq.s32.totalorder %s179, 0
      %s182 = sadd.s32 %s181, 1
      %s183 = scalar_select %p180, %s181, %s182
      %p186 = pneg %p180
      %p187 = scmp.eq.s32.totalorder %s19, 1
      %p188 = por %p186, %p187
      %p189 = scmp.ne.s32.totalorder %s181, %s184
      %p190 = scmp.eq.s32.totalorder %s19, 0
      %p191 = por %p189, %p190
      %p192 = scmp.ne.s32.totalorder %s181, %s184
      %p193 = scmp.eq.s32.totalorder %s24, 1
      %p194 = por %p192, %p193
      %p195 = scmp.ne.s32.totalorder %s184, %s185
      %p196 = scmp.eq.s32.totalorder %s24, 0
      %p197 = por %p195, %p196
      %p198 = scmp.ne.s32.totalorder %s184, %s185
      %p199 = scmp.eq.s32.totalorder %s25, 1
      %p200 = por %p198, %p199
      %p202 = scmp.ne.s32.totalorder %s185, %s201
      %p203 = scmp.eq.s32.totalorder %s25, 0
      %p204 = por %p202, %p203
      %p205 = scmp.le.s32.totalorder 1, %s19
      %p206 = scmp.lt.s32.totalorder %s19, 3
      %p207 = pnand %p205, %p206
      %p208 = pneg %p207
      // Predicated region
      $region9: #{tpu_custom_call.1} parent=5 // pred_check
        _
      $region10: #{tpu_custom_call.1} parent=5 // pred_check_branch
        %210 = sbr.rel (%p207) target = $region12
      $region11: #{tpu_custom_call.1} parent=5 // pred_region
        %s211 = ssub.s32 %s19, 1
        // Predicated region
        $region13: #{tpu_custom_call.1} parent=11 // pred_check
          %p212 = pneg %p66
        $region14: #{tpu_custom_call.1} parent=11 // pred_check_branch
          %214 = sbr.rel (%p212) target = $region16
        $region15: #{tpu_custom_call.1} parent=11 // pred_region
          _
        $region16: #{tpu_custom_call.1} parent=11 // pred_fallthru
          _
        // Predicated region
        $region17: #{tpu_custom_call.1} parent=11 // pred_check
          %p215 = pneg %p87
        $region18: #{tpu_custom_call.1} parent=11 // pred_check_branch
          %217 = sbr.rel (%p215) target = $region20
        $region19: #{tpu_custom_call.1} parent=11 // pred_region
          _
        $region20: #{tpu_custom_call.1} parent=11 // pred_fallthru
          _
        // Predicated region
        $region21: #{tpu_custom_call.1} parent=11 // pred_check
          %p218 = pneg %p108
        $region22: #{tpu_custom_call.1} parent=11 // pred_check_branch
          %220 = sbr.rel (%p218) target = $region24
        $region23: #{tpu_custom_call.1} parent=11 // pred_region
          _
        $region24: #{tpu_custom_call.1} parent=11 // pred_fallthru
          _
        // Predicated region
        $region25: #{tpu_custom_call.1} parent=11 // pred_check
          %p221 = pneg %p129
        $region26: #{tpu_custom_call.1} parent=11 // pred_check_branch
          %223 = sbr.rel (%p221) target = $region28
        $region27: #{tpu_custom_call.1} parent=11 // pred_region
          _
        $region28: #{tpu_custom_call.1} parent=11 // pred_fallthru
          _
        // Predicated region
        $region29: #{tpu_custom_call.1} parent=11 // pred_check
          %p224 = pneg %p150
        $region30: #{tpu_custom_call.1} parent=11 // pred_check_branch
          %226 = sbr.rel (%p224) target = $region32
        $region31: #{tpu_custom_call.1} parent=11 // pred_region
          _
        $region32: #{tpu_custom_call.1} parent=11 // pred_fallthru
          _
        // Predicated region
        $region33: #{tpu_custom_call.1} parent=11 // pred_check
          %p227 = pneg %p171
        $region34: #{tpu_custom_call.1} parent=11 // pred_check_branch
          %229 = sbr.rel (%p227) target = $region36
        $region35: #{tpu_custom_call.1} parent=11 // pred_region
          _
        $region36: #{tpu_custom_call.1} parent=11 // pred_fallthru
          _
      $region12: #{tpu_custom_call.1} parent=5 // pred_fallthru
        _
      %p230 = scmp.lt.s32.totalorder %s19, 2
      // Predicated region
      $region37: #{tpu_custom_call.1} parent=5 // pred_check
        %p231 = pneg %p230
      $region38: #{tpu_custom_call.1} parent=5 // pred_check_branch
        %233 = sbr.rel (%p231) target = $region40
      $region39: #{tpu_custom_call.1} parent=5 // pred_region
        // Predicated region
        $region41: #{tpu_custom_call.1} parent=39 // pred_check
          %p234 = pneg %p39
        $region42: #{tpu_custom_call.1} parent=39 // pred_check_branch
          %236 = sbr.rel (%p234) target = $region44
        $region43: #{tpu_custom_call.1} parent=39 // pred_region
          %s237 = sand.u32 %s29, 1
          %s238 = scalar_lea.sflag [#allocation5], %s237
          %s239 = sand.u32 %s29, 1
          %s240 = smul.addr %s239, 8
          %s241 = scalar_lea.vmem [#allocation4], %s240
          %s243 = ssub.s32 128, 128
          %244 = vsyncadd %s238, %s243
          %s245 = smul.addr %s19, 2
          %s246 = smul.addr %s245, 64
          %s247 = scalar_lea.hbm %s0, %s246
          %s249 = sshll.u32 %s241, 4
          %s250 = int_to_ptr.vmem [resolvable:$true] %s249
          %252 = dma.hbm_to_vmem [thread:$0]  %s247, 128, %s250, %s238
        $region44: #{tpu_custom_call.1} parent=39 // pred_fallthru
          _
      $region40: #{tpu_custom_call.1} parent=5 // pred_fallthru
        _
      %p253 = scmp.le.s32.totalorder 1, %s19
      %p254 = scmp.lt.s32.totalorder %s19, 3
      %p255 = pnand %p253, %p254
      %p256 = pneg %p255
      // Predicated region
      $region45: #{tpu_custom_call.1} parent=5 // pred_check
        _
      $region46: #{tpu_custom_call.1} parent=5 // pred_check_branch
        %258 = sbr.rel (%p255) target = $region48
      $region47: #{tpu_custom_call.1} parent=5 // pred_region
        %s259 = ssub.s32 %s19, 1
        %s260 = sand.u32 %s32, 1
        %s261 = scalar_lea.sflag [#allocation5], %s260
        %s262 = sand.u32 %s32, 1
        %s263 = smul.addr %s262, 8
        %s264 = scalar_lea.vmem [#allocation4], %s263
        // Predicated region
        $region49: #{tpu_custom_call.1} parent=47 // pred_check
          %p265 = pneg %p45
        $region50: #{tpu_custom_call.1} parent=47 // pred_check_branch
          %267 = sbr.rel (%p265) target = $region52
        $region51: #{tpu_custom_call.1} parent=47 // pred_region
          %268 = dma.done %s261, 128
        $region52: #{tpu_custom_call.1} parent=47 // pred_fallthru
          _
        %s269 = sand.u32 %s32, 1
        %s270 = scalar_lea.sflag [#allocation5], %s269
        %s271 = sand.u32 %s32, 1
        %s272 = smul.addr %s271, 8
        %s273 = scalar_lea.vmem [#allocation4], %s272
        %p274 = pneg %p45
        %p275 = pneg %p42
        %p276 = pneg %p66
        %p277 = pneg %p63
        %p278 = pneg %p87
        %p279 = pneg %p84
        %p280 = pneg %p108
        %p281 = pneg %p105
        %p282 = pneg %p129
        %p283 = pneg %p126
        %p284 = pneg %p150
        %p285 = pneg %p147
        %p286 = pneg %p171
        %p287 = pneg %p168
        %p288 = pneg %p197
        %p289 = pneg %p194
        %s290 = sand.u32 %s184, 1
        %s291 = scalar_lea.sflag [#allocation6], %s290
        %s292 = sand.u32 %s184, 1
        %s293 = smul.addr %s292, 8
        %s294 = scalar_lea.vmem [#allocation7], %s293
        %295 = vst [vmem:[#allocation2] sm:$0xff] 0.0
        %vm296 = vcmask 863232
        %297 = vst.msk [vmem:[#allocation2 + $0x8] sm:$0xf] %vm296, 0.0
        %v298 = vld [vmem:[%s264] sm:$0xff]
        %300 = vrot.lane.b32.xlu0 %v298, 38
        %v301 = vpop.permute.xlu0 %300
        %vm303 = vcmask 437552
        %304 = vst.msk [vmem:[#allocation2] sm:$0xf] %vm303, %v301
        %305 = vrot.lane.b32.xlu0 %v298, 40
        %v306 = vpop.permute.xlu0 %305
        %vm308 = vcmask 585152
        %309 = vst.msk [vmem:[#allocation2] sm:$0xf] %vm308, %v306
        %310 = vrot.lane.b32.xlu0 %v298, 42
        %v311 = vpop.permute.xlu0 %310
        %vm313 = vcmask 732752
        %314 = vst.msk [vmem:[#allocation2] sm:$0xf] %vm313, %v311
        %315 = vrot.lane.b32.xlu0 %v298, 44
        %v316 = vpop.permute.xlu0 %315
        %vm318 = vcmask 880352
        %319 = vst.msk [vmem:[#allocation2] sm:$0xf] %vm318, %v316
        %320 = vrot.lane.b32.xlu0 %v298, 46
        %v321 = vpop.permute.xlu0 %320
        %vm323 = vcmask 1027952
        %324 = vst.msk [vmem:[#allocation2] sm:$0xf] %vm323, %v321
        %325 = vrot.lane.b32.xlu0 %v298, 48
        %v326 = vpop.permute.xlu0 %325
        %vm328 = vcmask 125952
        %329 = vst.msk [vmem:[#allocation2 + $0x4] sm:$0xf] %vm328, %v326
        %330 = vrot.lane.b32.xlu0 %v298, 50
        %v331 = vpop.permute.xlu0 %330
        %vm333 = vcmask 273552
        %334 = vst.msk [vmem:[#allocation2 + $0x4] sm:$0xf] %vm333, %v331
        %335 = vrot.lane.b32.xlu0 %v298, 52
        %v336 = vpop.permute.xlu0 %335
        %vm338 = vcmask 421152
        %339 = vst.msk [vmem:[#allocation2 + $0x4] sm:$0xf] %vm338, %v336
        %340 = vrot.lane.b32.xlu0 %v298, 54
        %v341 = vpop.permute.xlu0 %340
        %v342 = vrot.slane %v341, 4
        %vm343 = vcmask 441344
        %v344 = vsel %vm343, %v341, %v342
        %vm346 = vcmask 568752
        %347 = vst.msk [vmem:[#allocation2 + $0x4] sm:$0xf] %vm346, %v344
        %348 = vrot.lane.b32.xlu0 %v298, 56
        %v349 = vpop.permute.xlu0 %348
        %v350 = vrot.slane %v349, 4
        %vm351 = vcmask 457728
        %v352 = vsel %vm351, %v349, %v350
        %vm354 = vcmask 716352
        %355 = vst.msk [vmem:[#allocation2 + $0x4] sm:$0xf] %vm354, %v352
        %356 = vrot.lane.b32.xlu0 %v298, 58
        %v357 = vpop.permute.xlu0 %356
        %v358 = vrot.slane %v357, 4
        %vm359 = vcmask 474112
        %v360 = vsel %vm359, %v357, %v358
        %vm362 = vcmask 863952
        %363 = vst.msk [vmem:[#allocation2 + $0x4] sm:$0xf] %vm362, %v360
        %364 = vrot.lane.b32.xlu0 %v298, 60
        %v365 = vpop.permute.xlu0 %364
        %v366 = vrot.slane %v365, 4
        %vm367 = vcmask 490496
        %v368 = vsel %vm367, %v365, %v366
        %vm370 = vcmask 1011552
        %371 = vst.msk [vmem:[#allocation2 + $0x4] sm:$0xf] %vm370, %v368
        %372 = vrot.lane.b32.xlu0 %v298, 62
        %v373 = vpop.permute.xlu0 %372
        %v374 = vrot.slane %v373, 4
        %vm375 = vcmask 506880
        %v376 = vsel %vm375, %v373, %v374
        %vm378 = vcmask 1044464
        %vm379 = vcmask 113668
        %vm380 = vmor %vm379, %vm378
        %381 = vst.msk [vmem:[#allocation2 + $0x4] sm:$0xff] %vm380, %v376
        %382 = vrot.lane.b32.xlu0 %v298, 64
        %v383 = vpop.permute.xlu0 %382
        %v384 = vrot.slane %v383, 4
        %vm386 = vcmask 257152
        %387 = vst.msk [vmem:[#allocation2 + $0x8] sm:$0xf] %vm386, %v384
        %388 = vrot.lane.b32.xlu0 %v298, 66
        %v389 = vpop.permute.xlu0 %388
        %v390 = vrot.slane %v389, 4
        %vm392 = vcmask 404752
        %393 = vst.msk [vmem:[#allocation2 + $0x8] sm:$0xf] %vm392, %v390
        %394 = vrot.lane.b32.xlu0 %v298, 68
        %v395 = vpop.permute.xlu0 %394
        %v396 = vrot.slane %v395, 4
        %vm398 = vcmask 552352
        %399 = vst.msk [vmem:[#allocation2 + $0x8] sm:$0xf] %vm398, %v396
        %v400 = vld [vmem:[#allocation2] sm:$0xff]
        %v401 = vld [vmem:[#allocation2 + $0x8] sm:$0xf]
        %v403 = vcombine.high %v400, %v400
        %405 = vst [vmem:[#allocation3] sm:$0xf] %v400
        %406 = vst [vmem:[#allocation3 + $0x8] sm:$0xf] %v403
        %vm407 = vcmask 551936
        %408 = vst.msk [vmem:[#allocation3 + $0x10] sm:$0xf] %vm407, %v401
        %v409 = vld [vmem:[#allocation2] sm:$0xff]
        %v410 = vld [vmem:[#allocation2 + $0x8] sm:$0xf]
        %v413 = vcombine.low %v409, %v409
        %v414 = vcombine.low %v410, %v410
        %415 = vrot.lane.b32.xlu0 %v413, 127
        %v416 = vpop.permute.xlu0 %415
        %417 = vrot.lane.b32.xlu0 %v409, 127
        %v418 = vpop.permute.xlu0 %417
        %419 = vrot.lane.b32.xlu0 %v414, 127
        %v420 = vpop.permute.xlu0 %419
        %vm421 = vcmask 1039360
        %v422 = vsel %vm421, %v416, %v418
        %v423 = vsel %vm421, %v418, %v420
        %427 = vst [vmem:[#allocation3] sm:$0xf0] %v422
        %428 = vst [vmem:[#allocation3 + $0x8] sm:$0xf0] %v423
        %vm429 = vcmask 556036
        %430 = vst.msk [vmem:[#allocation3 + $0x10] sm:$0xf0] %vm429, %v420
        %v431 = vld [vmem:[#allocation2] sm:$0xff]
        %v432 = vld [vmem:[#allocation2 + $0x8] sm:$0xf]
        %v435 = vcombine.high %v431, %v431
        %436 = vrot.lane.b32.xlu0 %v431, 126
        %v437 = vpop.permute.xlu0 %436
        %438 = vrot.lane.b32.xlu0 %v435, 126
        %v439 = vpop.permute.xlu0 %438
        %440 = vrot.lane.b32.xlu0 %v432, 126
        %v441 = vpop.permute.xlu0 %440
        %vm442 = vcmask 1031168
        %v443 = vsel %vm442, %v437, %v439
        %v444 = vsel %vm442, %v439, %v441
        %448 = vst [vmem:[#allocation3 + $0x18] sm:$0xf] %v443
        %449 = vst [vmem:[#allocation3 + $0x20] sm:$0xf] %v444
        %450 = vst.msk [vmem:[#allocation3 + $0x28] sm:$0xf] %vm407, %v441
        %v451 = vld [vmem:[#allocation2] sm:$0xff]
        %v452 = vld [vmem:[#allocation2 + $0x8] sm:$0xf]
        %v455 = vcombine.low %v451, %v451
        %v456 = vcombine.low %v452, %v452
        %457 = vrot.lane.b32.xlu0 %v455, 110
        %v458 = vpop.permute.xlu0 %457
        %459 = vrot.lane.b32.xlu0 %v451, 110
        %v460 = vpop.permute.xlu0 %459
        %461 = vrot.lane.b32.xlu0 %v456, 110
        %v462 = vpop.permute.xlu0 %461
        %vm463 = vcmask 900096
        %v464 = vsel %vm463, %v458, %v460
        %v465 = vsel %vm463, %v460, %v462
        %469 = vst [vmem:[#allocation3 + $0x18] sm:$0xf0] %v464
        %470 = vst [vmem:[#allocation3 + $0x20] sm:$0xf0] %v465
        %471 = vst.msk [vmem:[#allocation3 + $0x28] sm:$0xf0] %vm429, %v462
        %v472 = vld [vmem:[#allocation2] sm:$0xff]
        %v473 = vld [vmem:[#allocation2 + $0x8] sm:$0xf]
        %v476 = vcombine.high %v472, %v472
        %477 = vrot.lane.b32.xlu0 %v472, 109
        %v478 = vpop.permute.xlu0 %477
        %479 = vrot.lane.b32.xlu0 %v476, 109
        %v480 = vpop.permute.xlu0 %479
        %481 = vrot.lane.b32.xlu0 %v473, 109
        %v482 = vpop.permute.xlu0 %481
        %vm483 = vcmask 891904
        %v484 = vsel %vm483, %v478, %v480
        %v485 = vsel %vm483, %v480, %v482
        %489 = vst [vmem:[#allocation3 + $0x30] sm:$0xf] %v484
        %490 = vst [vmem:[#allocation3 + $0x38] sm:$0xf] %v485
        %491 = vst.msk [vmem:[#allocation3 + $0x40] sm:$0xf] %vm407, %v482
        %v492 = vld [vmem:[#allocation2] sm:$0xff]
        %v493 = vld [vmem:[#allocation2 + $0x8] sm:$0xf]
        %v496 = vcombine.low %v492, %v492
        %v497 = vcombine.low %v493, %v493
        %498 = vrot.lane.b32.xlu0 %v496, 108
        %v499 = vpop.permute.xlu0 %498
        %500 = vrot.lane.b32.xlu0 %v492, 108
        %v501 = vpop.permute.xlu0 %500
        %502 = vrot.lane.b32.xlu0 %v497, 108
        %v503 = vpop.permute.xlu0 %502
        %vm504 = vcmask 883712
        %v505 = vsel %vm504, %v499, %v501
        %v506 = vsel %vm504, %v501, %v503
        %510 = vst [vmem:[#allocation3 + $0x30] sm:$0xf0] %v505
        %511 = vst [vmem:[#allocation3 + $0x38] sm:$0xf0] %v506
        %512 = vst.msk [vmem:[#allocation3 + $0x40] sm:$0xf0] %vm429, %v503
        %v513 = vld [vmem:[#allocation2] sm:$0xff]
        %v514 = vld [vmem:[#allocation2 + $0x8] sm:$0xf]
        %v517 = vcombine.high %v513, %v513
        %518 = vrot.lane.b32.xlu0 %v513, 92
        %v519 = vpop.permute.xlu0 %518
        %520 = vrot.lane.b32.xlu0 %v517, 92
        %v521 = vpop.permute.xlu0 %520
        %522 = vrot.lane.b32.xlu0 %v514, 92
        %v523 = vpop.permute.xlu0 %522
        %vm524 = vcmask 752640
        %v525 = vsel %vm524, %v519, %v521
        %v526 = vsel %vm524, %v521, %v523
        %530 = vst [vmem:[#allocation3 + $0x48] sm:$0xf] %v525
        %531 = vst [vmem:[#allocation3 + $0x50] sm:$0xf] %v526
        %532 = vst.msk [vmem:[#allocation3 + $0x58] sm:$0xf] %vm407, %v523
        %v533 = vld [vmem:[#allocation2] sm:$0xff]
        %v534 = vld [vmem:[#allocation2 + $0x8] sm:$0xf]
        %v537 = vcombine.low %v533, %v533
        %v538 = vcombine.low %v534, %v534
        %539 = vrot.lane.b32.xlu0 %v537, 91
        %v540 = vpop.permute.xlu0 %539
        %541 = vrot.lane.b32.xlu0 %v533, 91
        %v542 = vpop.permute.xlu0 %541
        %543 = vrot.lane.b32.xlu0 %v538, 91
        %v544 = vpop.permute.xlu0 %543
        %vm545 = vcmask 744448
        %v546 = vsel %vm545, %v540, %v542
        %v547 = vsel %vm545, %v542, %v544
        %551 = vst [vmem:[#allocation3 + $0x48] sm:$0xf0] %v546
        %552 = vst [vmem:[#allocation3 + $0x50] sm:$0xf0] %v547
        %553 = vst.msk [vmem:[#allocation3 + $0x58] sm:$0xf0] %vm429, %v544
        %v554 = vld [vmem:[#allocation2] sm:$0xff]
        %v555 = vld [vmem:[#allocation2 + $0x8] sm:$0xf]
        %v558 = vcombine.high %v554, %v554
        %559 = vrot.lane.b32.xlu0 %v554, 90
        %v560 = vpop.permute.xlu0 %559
        %561 = vrot.lane.b32.xlu0 %v558, 90
        %v562 = vpop.permute.xlu0 %561
        %563 = vrot.lane.b32.xlu0 %v555, 90
        %v564 = vpop.permute.xlu0 %563
        %vm565 = vcmask 736256
        %v566 = vsel %vm565, %v560, %v562
        %v567 = vsel %vm565, %v562, %v564
        %571 = vst [vmem:[#allocation3 + $0x60] sm:$0xf] %v566
        %572 = vst [vmem:[#allocation3 + $0x68] sm:$0xf] %v567
        %573 = vst.msk [vmem:[#allocation3 + $0x70] sm:$0xf] %vm407, %v564
        %v574 = vld [vmem:[%s1] sm:$0xf]
        %v575 = vld [vmem:[#allocation3] sm:$0xff]
        %v576 = vld [vmem:[#allocation3 + $0x8] sm:$0xff]
        %v577 = vld [vmem:[#allocation3 + $0x10] sm:$0xff]
        %v578 = vld [vmem:[#allocation3 + $0x18] sm:$0xff]
        %v579 = vld [vmem:[#allocation3 + $0x20] sm:$0xff]
        %v580 = vld [vmem:[#allocation3 + $0x28] sm:$0xff]
        %v581 = vld [vmem:[#allocation3 + $0x30] sm:$0xff]
        %v582 = vld [vmem:[#allocation3 + $0x38] sm:$0xff]
        %v583 = vld [vmem:[#allocation3 + $0x40] sm:$0xff]
        %v584 = vld [vmem:[#allocation3 + $0x48] sm:$0xff]
        %v585 = vld [vmem:[#allocation3 + $0x50] sm:$0xff]
        %v586 = vld [vmem:[#allocation3 + $0x58] sm:$0xff]
        %v587 = vld [vmem:[#allocation3 + $0x60] sm:$0xf]
        %v588 = vld [vmem:[#allocation3 + $0x68] sm:$0xf]
        %v589 = vld [vmem:[#allocation3 + $0x70] sm:$0xf]
        %v590 = vld [vmem:[%s2] sm:$0xf]
        %592 = vset.pattern.permute.xlu0 0
        %593 = vperm.xlu0 %592, %v590
        %v594 = vpop.permute.xlu0 %593
        %vm596 = vcmask 293888
        %v598 = vsel %vm596, %v574, 0
        %vm600 = vcmask 1043456
        %v602 = vsel %vm600, %v587, 0
        %v605 = vsel %vm600, %v588, 0
        %v608 = vsel %vm600, %v589, 0
        %610 = vmatprep.subr.mxu0 %v576
        %611 = vmatpush1.msra.mxu0 %v575
        %612 = vmatprep.subr.mxu0 %v579
        %613 = vmatpush1.msra.mxu0 %v578
        %614 = vmatprep.subr.mxu0 %v582
        %615 = vmatpush1.msra.mxu0 %v581
        %616 = vmatprep.subr.mxu0 %v585
        %617 = vmatpush1.msra.mxu0 %v584
        %618 = vmatprep.subr.mxu0 %v605
        %619 = vmatpush1.msra.mxu0 %v602
        %620 = vmatprep.subr.mxu0 0.0
        %621 = vmatpush1.msra.mxu0 0.0
        %622 = vmatprep.subr.mxu0 0.0
        %623 = vmatpush1.msra.mxu0 0.0
        %624 = vmatprep.subr.mxu0 0.0
        %625 = vmatpush1.msra.mxu0 0.0
        %626 = vmatprep.subr.mxu0 0.0
        %627 = vmatpush1.msra.mxu0 0.0
        %628 = vmatprep.subr.mxu0 0.0
        %629 = vmatpush1.msra.mxu0 0.0
        %630 = vmatprep.subr.mxu0 0.0
        %631 = vmatpush1.msra.mxu0 0.0
        %632 = vmatprep.subr.mxu0 0.0
        %633 = vmatpush1.msra.mxu0 0.0
        %634 = vmatprep.subr.mxu0 0.0
        %635 = vmatpush1.msra.mxu0 0.0
        %636 = vmatprep.subr.mxu0 0.0
        %637 = vmatpush1.msra.mxu0 0.0
        %638 = vmatprep.subr.mxu0 0.0
        %639 = vmatpush1.msra.mxu0 0.0
        %640 = vmatprep.subr.mxu0 0.0
        %641 = vmatpush1.msra.mxu0 0.0
        %642 = vmatprep.subr.mxu0 0.0
        %643 = vmatpush1.msra.mxu0 0.0
        %644 = vmatprep.subr.mxu0 0.0
        %645 = vmatpush1.msra.mxu0 0.0
        %646 = vmatprep.subr.mxu0 0.0
        %647 = vmatpush1.msra.mxu0 0.0
        %648 = vmatprep.subr.mxu0 0.0
        %649 = vmatpush1.msra.mxu0 0.0
        %650 = vmatprep.subr.mxu0 0.0
        %651 = vmatpush1.msra.mxu0 0.0
        %652 = vmatprep.subr.mxu0 0.0
        %653 = vmatpush1.msra.mxu0 0.0
        %654 = vmatprep.subr.mxu0 0.0
        %655 = vmatpush1.msra.mxu0 0.0
        %656 = vmatprep.subr.mxu0 0.0
        %657 = vmatpush1.msra.mxu0 0.0
        %658 = vmatprep.subr.mxu0 0.0
        %659 = vmatpush1.msra.mxu0 0.0
        %660 = vmatprep.subr.mxu0 0.0
        %661 = vmatpush1.msra.mxu0 0.0
        %662 = vmatprep.subr.mxu0 0.0
        %663 = vmatpush1.msra.mxu0 0.0
        %664 = vmatprep.subr.mxu0 0.0
        %665 = vmatpush1.msra.mxu0 0.0
        %666 = vmatprep.subr.mxu0 0.0
        %667 = vmatpush1.msra.mxu0 0.0
        %668 = vmatprep.subr.mxu0 0.0
        %669 = vmatpush1.msra.mxu0 0.0
        %670 = vmatprep.subr.mxu0 0.0
        %671 = vmatpush1.msra.mxu0 0.0
        %672 = vmatprep.subr.mxu0 0.0
        %673 = vmatpush1.msra.mxu0 0.0
        %674 = vmatprep.mubr.f32.mxu0 0.0
        %675 = vmatmul.mubr.f32.gmra.mrb[0].mxu0 %v598
        %v676 = vpop.f32.mrb[0].mxu0
        %v677 = vadd.f32 %v594, %v676
        %v678 = vpop.f32.mrb[0].mxu0
        %v679 = vadd.f32 %v594, %v678
        %680 = vdwg.mxu0
        %681 = vmatprep.subr.mxu0 0.0
        %682 = vmatpush1.msra.mxu0 %v577
        %683 = vmatprep.subr.mxu0 0.0
        %684 = vmatpush1.msra.mxu0 %v580
        %685 = vmatprep.subr.mxu0 0.0
        %686 = vmatpush1.msra.mxu0 %v583
        %687 = vmatprep.subr.mxu0 0.0
        %688 = vmatpush1.msra.mxu0 %v586
        %689 = vmatprep.subr.mxu0 0.0
        %690 = vmatpush1.msra.mxu0 %v608
        %691 = vmatprep.subr.mxu0 0.0
        %692 = vmatpush1.msra.mxu0 0.0
        %693 = vmatprep.subr.mxu0 0.0
        %694 = vmatpush1.msra.mxu0 0.0
        %695 = vmatprep.subr.mxu0 0.0
        %696 = vmatpush1.msra.mxu0 0.0
        %697 = vmatprep.subr.mxu0 0.0
        %698 = vmatpush1.msra.mxu0 0.0
        %699 = vmatprep.subr.mxu0 0.0
        %700 = vmatpush1.msra.mxu0 0.0
        %701 = vmatprep.subr.mxu0 0.0
        %702 = vmatpush1.msra.mxu0 0.0
        %703 = vmatprep.subr.mxu0 0.0
        %704 = vmatpush1.msra.mxu0 0.0
        %705 = vmatprep.subr.mxu0 0.0
        %706 = vmatpush1.msra.mxu0 0.0
        %707 = vmatprep.subr.mxu0 0.0
        %708 = vmatpush1.msra.mxu0 0.0
        %709 = vmatprep.subr.mxu0 0.0
        %710 = vmatpush1.msra.mxu0 0.0
        %711 = vmatprep.subr.mxu0 0.0
        %712 = vmatpush1.msra.mxu0 0.0
        %713 = vmatprep.subr.mxu0 0.0
        %714 = vmatpush1.msra.mxu0 0.0
        %715 = vmatprep.subr.mxu0 0.0
        %716 = vmatpush1.msra.mxu0 0.0
        %717 = vmatprep.subr.mxu0 0.0
        %718 = vmatpush1.msra.mxu0 0.0
        %719 = vmatprep.subr.mxu0 0.0
        %720 = vmatpush1.msra.mxu0 0.0
        %721 = vmatprep.subr.mxu0 0.0
        %722 = vmatpush1.msra.mxu0 0.0
        %723 = vmatprep.subr.mxu0 0.0
        %724 = vmatpush1.msra.mxu0 0.0
        %725 = vmatprep.subr.mxu0 0.0
        %726 = vmatpush1.msra.mxu0 0.0
        %727 = vmatprep.subr.mxu0 0.0
        %728 = vmatpush1.msra.mxu0 0.0
        %729 = vmatprep.subr.mxu0 0.0
        %730 = vmatpush1.msra.mxu0 0.0
        %731 = vmatprep.subr.mxu0 0.0
        %732 = vmatpush1.msra.mxu0 0.0
        %733 = vmatprep.subr.mxu0 0.0
        %734 = vmatpush1.msra.mxu0 0.0
        %735 = vmatprep.subr.mxu0 0.0
        %736 = vmatpush1.msra.mxu0 0.0
        %737 = vmatprep.subr.mxu0 0.0
        %738 = vmatpush1.msra.mxu0 0.0
        %739 = vmatprep.subr.mxu0 0.0
        %740 = vmatpush1.msra.mxu0 0.0
        %741 = vmatprep.subr.mxu0 0.0
        %742 = vmatpush1.msra.mxu0 0.0
        %743 = vmatprep.subr.mxu0 0.0
        %744 = vmatpush1.msra.mxu0 0.0
        %745 = vmatprep.mubr.f32.mxu0 0.0
        %746 = vmatmul.mubr.f32.gmra.mrb[0].mxu0 %v598
        %v747 = vpop.f32.mrb[0].mxu0
        %v748 = vadd.f32 %v594, %v747
        %v749 = vpop.f32.mrb[0].mxu0
        %750 = vdwg.mxu0
        %vm751 = vcmp.gt.f32.partialorder %v677, 0.0
        %vm752 = vcmp.gt.f32.partialorder %v679, 0.0
        %vm753 = vcmp.gt.f32.partialorder %v748, 0.0
        %v754 = vmin.f32 %v677, 0.0
        %v755 = vmin.f32 %v679, 0.0
        %v756 = vmin.f32 %v748, 0.0
        %v757 = vmul.f32 %v754, 1.442695
        %v758 = vpow.pop %v757
        %v759 = vmul.f32 %v755, 1.442695
        %v760 = vpow.pop %v759
        %v761 = vmul.f32 %v756, 1.442695
        %v762 = vpow.pop %v761
        %v763 = vsub.f32 %v758, 1.0
        %v764 = vsub.f32 %v760, 1.0
        %v765 = vsub.f32 %v762, 1.0
        %v766 = vsel %vm751, %v677, %v763
        %v767 = vsel %vm752, %v679, %v764
        %v768 = vsel %vm753, %v748, %v765
        %770 = vrot.lane.b32.xlu0 %v766, 19
        %v771 = vpop.permute.xlu0 %770
        %773 = vst.msk [vmem:[#allocation2] sm:$0xf] %vm303, %v771
        %774 = vst.msk [vmem:[#allocation2] sm:$0xf] %vm308, %v771
        %775 = vst.msk [vmem:[#allocation2] sm:$0xf] %vm313, %v771
        %776 = vst.msk [vmem:[#allocation2] sm:$0xf] %vm318, %v771
        %777 = vst.msk [vmem:[#allocation2] sm:$0xf] %vm323, %v771
        %778 = vst.msk [vmem:[#allocation2 + $0x4] sm:$0xf] %vm328, %v771
        %v780 = vcombine.low %v766, %v767
        %781 = vrot.lane.b32.xlu0 %v780, 19
        %v782 = vpop.permute.xlu0 %781
        %v783 = vrot.slane %v782, 4
        %vm784 = vcmask 154624
        %v785 = vsel %vm784, %v782, %v783
        %787 = vst.msk [vmem:[#allocation2 + $0x4] sm:$0xf] %vm333, %v785
        %788 = vrot.lane.b32.xlu0 %v767, 19
        %v789 = vpop.permute.xlu0 %788
        %791 = vst.msk [vmem:[#allocation2 + $0x4] sm:$0xf] %vm338, %v789
        %792 = vst.msk [vmem:[#allocation2 + $0x4] sm:$0xf] %vm346, %v789
        %793 = vst.msk [vmem:[#allocation2 + $0x4] sm:$0xf] %vm354, %v789
        %794 = vst.msk [vmem:[#allocation2 + $0x4] sm:$0xf] %vm362, %v789
        %795 = vst.msk [vmem:[#allocation2 + $0x4] sm:$0xf] %vm370, %v789
        %v796 = vrot.slane %v789, 4
        %v797 = vsel %vm784, %v796, %v789
        %799 = vst.msk [vmem:[#allocation2 + $0x4] sm:$0xff] %vm380, %v797
        %v801 = vcombine.low %v767, %v768
        %802 = vrot.lane.b32.xlu0 %v801, 19
        %v803 = vpop.permute.xlu0 %802
        %v804 = vrot.slane %v803, 4
        %v805 = vsel %vm784, %v803, %v804
        %807 = vst.msk [vmem:[#allocation2 + $0x8] sm:$0xf] %vm386, %v805
        %808 = vrot.lane.b32.xlu0 %v768, 19
        %v809 = vpop.permute.xlu0 %808
        %811 = vst.msk [vmem:[#allocation2 + $0x8] sm:$0xf] %vm392, %v809
        %812 = vst.msk [vmem:[#allocation2 + $0x8] sm:$0xf] %vm398, %v809
        %v813 = vld [vmem:[#allocation2] sm:$0xff]
        %v814 = vld [vmem:[#allocation2 + $0x8] sm:$0xf]
        %v816 = vcombine.high %v813, %v813
        %818 = vst [vmem:[#allocation3] sm:$0xf] %v813
        %819 = vst [vmem:[#allocation3 + $0x8] sm:$0xf] %v816
        %820 = vst.msk [vmem:[#allocation3 + $0x10] sm:$0xf] %vm407, %v814
        %v821 = vld [vmem:[#allocation2] sm:$0xff]
        %v822 = vld [vmem:[#allocation2 + $0x8] sm:$0xf]
        %v825 = vcombine.low %v821, %v821
        %v826 = vcombine.low %v822, %v822
        %827 = vrot.lane.b32.xlu0 %v825, 127
        %v828 = vpop.permute.xlu0 %827
        %829 = vrot.lane.b32.xlu0 %v821, 127
        %v830 = vpop.permute.xlu0 %829
        %831 = vrot.lane.b32.xlu0 %v826, 127
        %v832 = vpop.permute.xlu0 %831
        %v833 = vsel %vm421, %v828, %v830
        %v834 = vsel %vm421, %v830, %v832
        %838 = vst [vmem:[#allocation3] sm:$0xf0] %v833
        %839 = vst [vmem:[#allocation3 + $0x8] sm:$0xf0] %v834
        %840 = vst.msk [vmem:[#allocation3 + $0x10] sm:$0xf0] %vm429, %v832
        %v841 = vld [vmem:[#allocation2] sm:$0xff]
        %v842 = vld [vmem:[#allocation2 + $0x8] sm:$0xf]
        %v845 = vcombine.high %v841, %v841
        %846 = vrot.lane.b32.xlu0 %v841, 126
        %v847 = vpop.permute.xlu0 %846
        %848 = vrot.lane.b32.xlu0 %v845, 126
        %v849 = vpop.permute.xlu0 %848
        %850 = vrot.lane.b32.xlu0 %v842, 126
        %v851 = vpop.permute.xlu0 %850
        %v852 = vsel %vm442, %v847, %v849
        %v853 = vsel %vm442, %v849, %v851
        %857 = vst [vmem:[#allocation3 + $0x18] sm:$0xf] %v852
        %858 = vst [vmem:[#allocation3 + $0x20] sm:$0xf] %v853
        %859 = vst.msk [vmem:[#allocation3 + $0x28] sm:$0xf] %vm407, %v851
        %v860 = vld [vmem:[#allocation2] sm:$0xff]
        %v861 = vld [vmem:[#allocation2 + $0x8] sm:$0xf]
        %v864 = vcombine.low %v860, %v860
        %v865 = vcombine.low %v861, %v861
        %866 = vrot.lane.b32.xlu0 %v864, 110
        %v867 = vpop.permute.xlu0 %866
        %868 = vrot.lane.b32.xlu0 %v860, 110
        %v869 = vpop.permute.xlu0 %868
        %870 = vrot.lane.b32.xlu0 %v865, 110
        %v871 = vpop.permute.xlu0 %870
        %v872 = vsel %vm463, %v867, %v869
        %v873 = vsel %vm463, %v869, %v871
        %877 = vst [vmem:[#allocation3 + $0x18] sm:$0xf0] %v872
        %878 = vst [vmem:[#allocation3 + $0x20] sm:$0xf0] %v873
        %879 = vst.msk [vmem:[#allocation3 + $0x28] sm:$0xf0] %vm429, %v871
        %v880 = vld [vmem:[#allocation2] sm:$0xff]
        %v881 = vld [vmem:[#allocation2 + $0x8] sm:$0xf]
        %v884 = vcombine.high %v880, %v880
        %885 = vrot.lane.b32.xlu0 %v880, 109
        %v886 = vpop.permute.xlu0 %885
        %887 = vrot.lane.b32.xlu0 %v884, 109
        %v888 = vpop.permute.xlu0 %887
        %889 = vrot.lane.b32.xlu0 %v881, 109
        %v890 = vpop.permute.xlu0 %889
        %v891 = vsel %vm483, %v886, %v888
        %v892 = vsel %vm483, %v888, %v890
        %896 = vst [vmem:[#allocation3 + $0x30] sm:$0xf] %v891
        %897 = vst [vmem:[#allocation3 + $0x38] sm:$0xf] %v892
        %898 = vst.msk [vmem:[#allocation3 + $0x40] sm:$0xf] %vm407, %v890
        %v899 = vld [vmem:[#allocation2] sm:$0xff]
        %v900 = vld [vmem:[#allocation2 + $0x8] sm:$0xf]
        %v903 = vcombine.low %v899, %v899
        %v904 = vcombine.low %v900, %v900
        %905 = vrot.lane.b32.xlu0 %v903, 108
        %v906 = vpop.permute.xlu0 %905
        %907 = vrot.lane.b32.xlu0 %v899, 108
        %v908 = vpop.permute.xlu0 %907
        %909 = vrot.lane.b32.xlu0 %v904, 108
        %v910 = vpop.permute.xlu0 %909
        %v911 = vsel %vm504, %v906, %v908
        %v912 = vsel %vm504, %v908, %v910
        %916 = vst [vmem:[#allocation3 + $0x30] sm:$0xf0] %v911
        %917 = vst [vmem:[#allocation3 + $0x38] sm:$0xf0] %v912
        %918 = vst.msk [vmem:[#allocation3 + $0x40] sm:$0xf0] %vm429, %v910
        %v919 = vld [vmem:[#allocation2] sm:$0xff]
        %v920 = vld [vmem:[#allocation2 + $0x8] sm:$0xf]
        %v923 = vcombine.high %v919, %v919
        %924 = vrot.lane.b32.xlu0 %v919, 92
        %v925 = vpop.permute.xlu0 %924
        %926 = vrot.lane.b32.xlu0 %v923, 92
        %v927 = vpop.permute.xlu0 %926
        %928 = vrot.lane.b32.xlu0 %v920, 92
        %v929 = vpop.permute.xlu0 %928
        %v930 = vsel %vm524, %v925, %v927
        %v931 = vsel %vm524, %v927, %v929
        %935 = vst [vmem:[#allocation3 + $0x48] sm:$0xf] %v930
        %936 = vst [vmem:[#allocation3 + $0x50] sm:$0xf] %v931
        %937 = vst.msk [vmem:[#allocation3 + $0x58] sm:$0xf] %vm407, %v929
        %v938 = vld [vmem:[#allocation2] sm:$0xff]
        %v939 = vld [vmem:[#allocation2 + $0x8] sm:$0xf]
        %v942 = vcombine.low %v938, %v938
        %v943 = vcombine.low %v939, %v939
        %944 = vrot.lane.b32.xlu0 %v942, 91
        %v945 = vpop.permute.xlu0 %944
        %946 = vrot.lane.b32.xlu0 %v938, 91
        %v947 = vpop.permute.xlu0 %946
        %948 = vrot.lane.b32.xlu0 %v943, 91
        %v949 = vpop.permute.xlu0 %948
        %v950 = vsel %vm545, %v945, %v947
        %v951 = vsel %vm545, %v947, %v949
        %955 = vst [vmem:[#allocation3 + $0x48] sm:$0xf0] %v950
        %956 = vst [vmem:[#allocation3 + $0x50] sm:$0xf0] %v951
        %957 = vst.msk [vmem:[#allocation3 + $0x58] sm:$0xf0] %vm429, %v949
        %v958 = vld [vmem:[#allocation2] sm:$0xff]
        %v959 = vld [vmem:[#allocation2 + $0x8] sm:$0xf]
        %v962 = vcombine.high %v958, %v958
        %963 = vrot.lane.b32.xlu0 %v958, 90
        %v964 = vpop.permute.xlu0 %963
        %965 = vrot.lane.b32.xlu0 %v962, 90
        %v966 = vpop.permute.xlu0 %965
        %967 = vrot.lane.b32.xlu0 %v959, 90
        %v968 = vpop.permute.xlu0 %967
        %v969 = vsel %vm565, %v964, %v966
        %v970 = vsel %vm565, %v966, %v968
        %974 = vst [vmem:[#allocation3 + $0x60] sm:$0xf] %v969
        %975 = vst [vmem:[#allocation3 + $0x68] sm:$0xf] %v970
        %976 = vst.msk [vmem:[#allocation3 + $0x70] sm:$0xf] %vm407, %v968
        %v977 = vld [vmem:[%s3] sm:$0xf]
        %v978 = vld [vmem:[#allocation3] sm:$0xff]
        %v979 = vld [vmem:[#allocation3 + $0x8] sm:$0xff]
        %v980 = vld [vmem:[#allocation3 + $0x10] sm:$0xff]
        %v981 = vld [vmem:[#allocation3 + $0x18] sm:$0xff]
        %v982 = vld [vmem:[#allocation3 + $0x20] sm:$0xff]
        %v983 = vld [vmem:[#allocation3 + $0x28] sm:$0xff]
        %v984 = vld [vmem:[#allocation3 + $0x30] sm:$0xff]
        %v985 = vld [vmem:[#allocation3 + $0x38] sm:$0xff]
        %v986 = vld [vmem:[#allocation3 + $0x40] sm:$0xff]
        %v987 = vld [vmem:[#allocation3 + $0x48] sm:$0xff]
        %v988 = vld [vmem:[#allocation3 + $0x50] sm:$0xff]
        %v989 = vld [vmem:[#allocation3 + $0x58] sm:$0xff]
        %v990 = vld [vmem:[#allocation3 + $0x60] sm:$0xf]
        %v991 = vld [vmem:[#allocation3 + $0x68] sm:$0xf]
        %v992 = vld [vmem:[#allocation3 + $0x70] sm:$0xf]
        %v993 = vld [vmem:[%s4] sm:$0xf]
        %995 = vset.pattern.permute.xlu0 0
        %996 = vperm.xlu0 %995, %v993
        %v997 = vpop.permute.xlu0 %996
        %v1000 = vsel %vm596, %v977, 0
        %v1003 = vsel %vm600, %v990, 0
        %v1006 = vsel %vm600, %v991, 0
        %v1009 = vsel %vm600, %v992, 0
        %1011 = vmatprep.subr.mxu0 %v979
        %1012 = vmatpush1.msra.mxu0 %v978
        %1013 = vmatprep.subr.mxu0 %v982
        %1014 = vmatpush1.msra.mxu0 %v981
        %1015 = vmatprep.subr.mxu0 %v985
        %1016 = vmatpush1.msra.mxu0 %v984
        %1017 = vmatprep.subr.mxu0 %v988
        %1018 = vmatpush1.msra.mxu0 %v987
        %1019 = vmatprep.subr.mxu0 %v1006
        %1020 = vmatpush1.msra.mxu0 %v1003
        %1021 = vmatprep.subr.mxu0 0.0
        %1022 = vmatpush1.msra.mxu0 0.0
        %1023 = vmatprep.subr.mxu0 0.0
        %1024 = vmatpush1.msra.mxu0 0.0
        %1025 = vmatprep.subr.mxu0 0.0
        %1026 = vmatpush1.msra.mxu0 0.0
        %1027 = vmatprep.subr.mxu0 0.0
        %1028 = vmatpush1.msra.mxu0 0.0
        %1029 = vmatprep.subr.mxu0 0.0
        %1030 = vmatpush1.msra.mxu0 0.0
        %1031 = vmatprep.subr.mxu0 0.0
        %1032 = vmatpush1.msra.mxu0 0.0
        %1033 = vmatprep.subr.mxu0 0.0
        %1034 = vmatpush1.msra.mxu0 0.0
        %1035 = vmatprep.subr.mxu0 0.0
        %1036 = vmatpush1.msra.mxu0 0.0
        %1037 = vmatprep.subr.mxu0 0.0
        %1038 = vmatpush1.msra.mxu0 0.0
        %1039 = vmatprep.subr.mxu0 0.0
        %1040 = vmatpush1.msra.mxu0 0.0
        %1041 = vmatprep.subr.mxu0 0.0
        %1042 = vmatpush1.msra.mxu0 0.0
        %1043 = vmatprep.subr.mxu0 0.0
        %1044 = vmatpush1.msra.mxu0 0.0
        %1045 = vmatprep.subr.mxu0 0.0
        %1046 = vmatpush1.msra.mxu0 0.0
        %1047 = vmatprep.subr.mxu0 0.0
        %1048 = vmatpush1.msra.mxu0 0.0
        %1049 = vmatprep.subr.mxu0 0.0
        %1050 = vmatpush1.msra.mxu0 0.0
        %1051 = vmatprep.subr.mxu0 0.0
        %1052 = vmatpush1.msra.mxu0 0.0
        %1053 = vmatprep.subr.mxu0 0.0
        %1054 = vmatpush1.msra.mxu0 0.0
        %1055 = vmatprep.subr.mxu0 0.0
        %1056 = vmatpush1.msra.mxu0 0.0
        %1057 = vmatprep.subr.mxu0 0.0
        %1058 = vmatpush1.msra.mxu0 0.0
        %1059 = vmatprep.subr.mxu0 0.0
        %1060 = vmatpush1.msra.mxu0 0.0
        %1061 = vmatprep.subr.mxu0 0.0
        %1062 = vmatpush1.msra.mxu0 0.0
        %1063 = vmatprep.subr.mxu0 0.0
        %1064 = vmatpush1.msra.mxu0 0.0
        %1065 = vmatprep.subr.mxu0 0.0
        %1066 = vmatpush1.msra.mxu0 0.0
        %1067 = vmatprep.subr.mxu0 0.0
        %1068 = vmatpush1.msra.mxu0 0.0
        %1069 = vmatprep.subr.mxu0 0.0
        %1070 = vmatpush1.msra.mxu0 0.0
        %1071 = vmatprep.subr.mxu0 0.0
        %1072 = vmatpush1.msra.mxu0 0.0
        %1073 = vmatprep.subr.mxu0 0.0
        %1074 = vmatpush1.msra.mxu0 0.0
        %1075 = vmatprep.mubr.f32.mxu0 0.0
        %1076 = vmatmul.mubr.f32.gmra.mrb[0].mxu0 %v1000
        %v1077 = vpop.f32.mrb[0].mxu0
        %v1078 = vadd.f32 %v997, %v1077
        %v1079 = vpop.f32.mrb[0].mxu0
        %v1080 = vadd.f32 %v997, %v1079
        %1081 = vdwg.mxu0
        %1082 = vmatprep.subr.mxu0 0.0
        %1083 = vmatpush1.msra.mxu0 %v980
        %1084 = vmatprep.subr.mxu0 0.0
        %1085 = vmatpush1.msra.mxu0 %v983
        %1086 = vmatprep.subr.mxu0 0.0
        %1087 = vmatpush1.msra.mxu0 %v986
        %1088 = vmatprep.subr.mxu0 0.0
        %1089 = vmatpush1.msra.mxu0 %v989
        %1090 = vmatprep.subr.mxu0 0.0
        %1091 = vmatpush1.msra.mxu0 %v1009
        %1092 = vmatprep.subr.mxu0 0.0
        %1093 = vmatpush1.msra.mxu0 0.0
        %1094 = vmatprep.subr.mxu0 0.0
        %1095 = vmatpush1.msra.mxu0 0.0
        %1096 = vmatprep.subr.mxu0 0.0
        %1097 = vmatpush1.msra.mxu0 0.0
        %1098 = vmatprep.subr.mxu0 0.0
        %1099 = vmatpush1.msra.mxu0 0.0
        %1100 = vmatprep.subr.mxu0 0.0
        %1101 = vmatpush1.msra.mxu0 0.0
        %1102 = vmatprep.subr.mxu0 0.0
        %1103 = vmatpush1.msra.mxu0 0.0
        %1104 = vmatprep.subr.mxu0 0.0
        %1105 = vmatpush1.msra.mxu0 0.0
        %1106 = vmatprep.subr.mxu0 0.0
        %1107 = vmatpush1.msra.mxu0 0.0
        %1108 = vmatprep.subr.mxu0 0.0
        %1109 = vmatpush1.msra.mxu0 0.0
        %1110 = vmatprep.subr.mxu0 0.0
        %1111 = vmatpush1.msra.mxu0 0.0
        %1112 = vmatprep.subr.mxu0 0.0
        %1113 = vmatpush1.msra.mxu0 0.0
        %1114 = vmatprep.subr.mxu0 0.0
        %1115 = vmatpush1.msra.mxu0 0.0
        %1116 = vmatprep.subr.mxu0 0.0
        %1117 = vmatpush1.msra.mxu0 0.0
        %1118 = vmatprep.subr.mxu0 0.0
        %1119 = vmatpush1.msra.mxu0 0.0
        %1120 = vmatprep.subr.mxu0 0.0
        %1121 = vmatpush1.msra.mxu0 0.0
        %1122 = vmatprep.subr.mxu0 0.0
        %1123 = vmatpush1.msra.mxu0 0.0
        %1124 = vmatprep.subr.mxu0 0.0
        %1125 = vmatpush1.msra.mxu0 0.0
        %1126 = vmatprep.subr.mxu0 0.0
        %1127 = vmatpush1.msra.mxu0 0.0
        %1128 = vmatprep.subr.mxu0 0.0
        %1129 = vmatpush1.msra.mxu0 0.0
        %1130 = vmatprep.subr.mxu0 0.0
        %1131 = vmatpush1.msra.mxu0 0.0
        %1132 = vmatprep.subr.mxu0 0.0
        %1133 = vmatpush1.msra.mxu0 0.0
        %1134 = vmatprep.subr.mxu0 0.0
        %1135 = vmatpush1.msra.mxu0 0.0
        %1136 = vmatprep.subr.mxu0 0.0
        %1137 = vmatpush1.msra.mxu0 0.0
        %1138 = vmatprep.subr.mxu0 0.0
        %1139 = vmatpush1.msra.mxu0 0.0
        %1140 = vmatprep.subr.mxu0 0.0
        %1141 = vmatpush1.msra.mxu0 0.0
        %1142 = vmatprep.subr.mxu0 0.0
        %1143 = vmatpush1.msra.mxu0 0.0
        %1144 = vmatprep.subr.mxu0 0.0
        %1145 = vmatpush1.msra.mxu0 0.0
        %1146 = vmatprep.mubr.f32.mxu0 0.0
        %1147 = vmatmul.mubr.f32.gmra.mrb[0].mxu0 %v1000
        %v1148 = vpop.f32.mrb[0].mxu0
        %v1149 = vadd.f32 %v997, %v1148
        %v1150 = vpop.f32.mrb[0].mxu0
        %1151 = vdwg.mxu0
        %vm1152 = vcmp.gt.f32.partialorder %v1078, 0.0
        %vm1153 = vcmp.gt.f32.partialorder %v1080, 0.0
        %vm1154 = vcmp.gt.f32.partialorder %v1149, 0.0
        %v1155 = vmin.f32 %v1078, 0.0
        %v1156 = vmin.f32 %v1080, 0.0
        %v1157 = vmin.f32 %v1149, 0.0
        %v1158 = vmul.f32 %v1155, 1.442695
        %v1159 = vpow.pop %v1158
        %v1160 = vmul.f32 %v1156, 1.442695
        %v1161 = vpow.pop %v1160
        %v1162 = vmul.f32 %v1157, 1.442695
        %v1163 = vpow.pop %v1162
        %v1164 = vsub.f32 %v1159, 1.0
        %v1165 = vsub.f32 %v1161, 1.0
        %v1166 = vsub.f32 %v1163, 1.0
        %v1167 = vsel %vm1152, %v1078, %v1164
        %v1168 = vsel %vm1153, %v1080, %v1165
        %v1169 = vsel %vm1154, %v1149, %v1166
        %1171 = vrot.lane.b32.xlu0 %v1167, 19
        %v1172 = vpop.permute.xlu0 %1171
        %1174 = vst.msk [vmem:[#allocation2] sm:$0xf] %vm303, %v1172
        %1175 = vst.msk [vmem:[#allocation2] sm:$0xf] %vm308, %v1172
        %1176 = vst.msk [vmem:[#allocation2] sm:$0xf] %vm313, %v1172
        %1177 = vst.msk [vmem:[#allocation2] sm:$0xf] %vm318, %v1172
        %1178 = vst.msk [vmem:[#allocation2] sm:$0xf] %vm323, %v1172
        %1179 = vst.msk [vmem:[#allocation2 + $0x4] sm:$0xf] %vm328, %v1172
        %v1181 = vcombine.low %v1167, %v1168
        %1182 = vrot.lane.b32.xlu0 %v1181, 19
        %v1183 = vpop.permute.xlu0 %1182
        %v1184 = vrot.slane %v1183, 4
        %v1185 = vsel %vm784, %v1183, %v1184
        %1187 = vst.msk [vmem:[#allocation2 + $0x4] sm:$0xf] %vm333, %v1185
        %1188 = vrot.lane.b32.xlu0 %v1168, 19
        %v1189 = vpop.permute.xlu0 %1188
        %1191 = vst.msk [vmem:[#allocation2 + $0x4] sm:$0xf] %vm338, %v1189
        %1192 = vst.msk [vmem:[#allocation2 + $0x4] sm:$0xf] %vm346, %v1189
        %1193 = vst.msk [vmem:[#allocation2 + $0x4] sm:$0xf] %vm354, %v1189
        %1194 = vst.msk [vmem:[#allocation2 + $0x4] sm:$0xf] %vm362, %v1189
        %1195 = vst.msk [vmem:[#allocation2 + $0x4] sm:$0xf] %vm370, %v1189
        %v1196 = vrot.slane %v1189, 4
        %v1197 = vsel %vm784, %v1196, %v1189
        %1199 = vst.msk [vmem:[#allocation2 + $0x4] sm:$0xff] %vm380, %v1197
        %v1201 = vcombine.low %v1168, %v1169
        %1202 = vrot.lane.b32.xlu0 %v1201, 19
        %v1203 = vpop.permute.xlu0 %1202
        %v1204 = vrot.slane %v1203, 4
        %v1205 = vsel %vm784, %v1203, %v1204
        %1207 = vst.msk [vmem:[#allocation2 + $0x8] sm:$0xf] %vm386, %v1205
        %1208 = vrot.lane.b32.xlu0 %v1169, 19
        %v1209 = vpop.permute.xlu0 %1208
        %1211 = vst.msk [vmem:[#allocation2 + $0x8] sm:$0xf] %vm392, %v1209
        %1212 = vst.msk [vmem:[#allocation2 + $0x8] sm:$0xf] %vm398, %v1209
        %v1213 = vld [vmem:[#allocation2] sm:$0xff]
        %v1214 = vld [vmem:[#allocation2 + $0x8] sm:$0xf]
        %v1216 = vcombine.high %v1213, %v1213
        %1218 = vst [vmem:[#allocation3] sm:$0xf] %v1213
        %1219 = vst [vmem:[#allocation3 + $0x8] sm:$0xf] %v1216
        %1220 = vst.msk [vmem:[#allocation3 + $0x10] sm:$0xf] %vm407, %v1214
        %v1221 = vld [vmem:[#allocation2] sm:$0xff]
        %v1222 = vld [vmem:[#allocation2 + $0x8] sm:$0xf]
        %v1225 = vcombine.low %v1221, %v1221
        %v1226 = vcombine.low %v1222, %v1222
        %1227 = vrot.lane.b32.xlu0 %v1225, 127
        %v1228 = vpop.permute.xlu0 %1227
        %1229 = vrot.lane.b32.xlu0 %v1221, 127
        %v1230 = vpop.permute.xlu0 %1229
        %1231 = vrot.lane.b32.xlu0 %v1226, 127
        %v1232 = vpop.permute.xlu0 %1231
        %v1233 = vsel %vm421, %v1228, %v1230
        %v1234 = vsel %vm421, %v1230, %v1232
        %1238 = vst [vmem:[#allocation3] sm:$0xf0] %v1233
        %1239 = vst [vmem:[#allocation3 + $0x8] sm:$0xf0] %v1234
        %1240 = vst.msk [vmem:[#allocation3 + $0x10] sm:$0xf0] %vm429, %v1232
        %v1241 = vld [vmem:[#allocation2] sm:$0xff]
        %v1242 = vld [vmem:[#allocation2 + $0x8] sm:$0xf]
        %v1245 = vcombine.high %v1241, %v1241
        %1246 = vrot.lane.b32.xlu0 %v1241, 126
        %v1247 = vpop.permute.xlu0 %1246
        %1248 = vrot.lane.b32.xlu0 %v1245, 126
        %v1249 = vpop.permute.xlu0 %1248
        %1250 = vrot.lane.b32.xlu0 %v1242, 126
        %v1251 = vpop.permute.xlu0 %1250
        %v1252 = vsel %vm442, %v1247, %v1249
        %v1253 = vsel %vm442, %v1249, %v1251
        %1257 = vst [vmem:[#allocation3 + $0x18] sm:$0xf] %v1252
        %1258 = vst [vmem:[#allocation3 + $0x20] sm:$0xf] %v1253
        %1259 = vst.msk [vmem:[#allocation3 + $0x28] sm:$0xf] %vm407, %v1251
        %v1260 = vld [vmem:[#allocation2] sm:$0xff]
        %v1261 = vld [vmem:[#allocation2 + $0x8] sm:$0xf]
        %v1264 = vcombine.low %v1260, %v1260
        %v1265 = vcombine.low %v1261, %v1261
        %1266 = vrot.lane.b32.xlu0 %v1264, 110
        %v1267 = vpop.permute.xlu0 %1266
        %1268 = vrot.lane.b32.xlu0 %v1260, 110
        %v1269 = vpop.permute.xlu0 %1268
        %1270 = vrot.lane.b32.xlu0 %v1265, 110
        %v1271 = vpop.permute.xlu0 %1270
        %v1272 = vsel %vm463, %v1267, %v1269
        %v1273 = vsel %vm463, %v1269, %v1271
        %1277 = vst [vmem:[#allocation3 + $0x18] sm:$0xf0] %v1272
        %1278 = vst [vmem:[#allocation3 + $0x20] sm:$0xf0] %v1273
        %1279 = vst.msk [vmem:[#allocation3 + $0x28] sm:$0xf0] %vm429, %v1271
        %v1280 = vld [vmem:[#allocation2] sm:$0xff]
        %v1281 = vld [vmem:[#allocation2 + $0x8] sm:$0xf]
        %v1284 = vcombine.high %v1280, %v1280
        %1285 = vrot.lane.b32.xlu0 %v1280, 109
        %v1286 = vpop.permute.xlu0 %1285
        %1287 = vrot.lane.b32.xlu0 %v1284, 109
        %v1288 = vpop.permute.xlu0 %1287
        %1289 = vrot.lane.b32.xlu0 %v1281, 109
        %v1290 = vpop.permute.xlu0 %1289
        %v1291 = vsel %vm483, %v1286, %v1288
        %v1292 = vsel %vm483, %v1288, %v1290
        %1296 = vst [vmem:[#allocation3 + $0x30] sm:$0xf] %v1291
        %1297 = vst [vmem:[#allocation3 + $0x38] sm:$0xf] %v1292
        %1298 = vst.msk [vmem:[#allocation3 + $0x40] sm:$0xf] %vm407, %v1290
        %v1299 = vld [vmem:[#allocation2] sm:$0xff]
        %v1300 = vld [vmem:[#allocation2 + $0x8] sm:$0xf]
        %v1303 = vcombine.low %v1299, %v1299
        %v1304 = vcombine.low %v1300, %v1300
        %1305 = vrot.lane.b32.xlu0 %v1303, 108
        %v1306 = vpop.permute.xlu0 %1305
        %1307 = vrot.lane.b32.xlu0 %v1299, 108
        %v1308 = vpop.permute.xlu0 %1307
        %1309 = vrot.lane.b32.xlu0 %v1304, 108
        %v1310 = vpop.permute.xlu0 %1309
        %v1311 = vsel %vm504, %v1306, %v1308
        %v1312 = vsel %vm504, %v1308, %v1310
        %1316 = vst [vmem:[#allocation3 + $0x30] sm:$0xf0] %v1311
        %1317 = vst [vmem:[#allocation3 + $0x38] sm:$0xf0] %v1312
        %1318 = vst.msk [vmem:[#allocation3 + $0x40] sm:$0xf0] %vm429, %v1310
        %v1319 = vld [vmem:[#allocation2] sm:$0xff]
        %v1320 = vld [vmem:[#allocation2 + $0x8] sm:$0xf]
        %v1323 = vcombine.high %v1319, %v1319
        %1324 = vrot.lane.b32.xlu0 %v1319, 92
        %v1325 = vpop.permute.xlu0 %1324
        %1326 = vrot.lane.b32.xlu0 %v1323, 92
        %v1327 = vpop.permute.xlu0 %1326
        %1328 = vrot.lane.b32.xlu0 %v1320, 92
        %v1329 = vpop.permute.xlu0 %1328
        %v1330 = vsel %vm524, %v1325, %v1327
        %v1331 = vsel %vm524, %v1327, %v1329
        %1335 = vst [vmem:[#allocation3 + $0x48] sm:$0xf] %v1330
        %1336 = vst [vmem:[#allocation3 + $0x50] sm:$0xf] %v1331
        %1337 = vst.msk [vmem:[#allocation3 + $0x58] sm:$0xf] %vm407, %v1329
        %v1338 = vld [vmem:[#allocation2] sm:$0xff]
        %v1339 = vld [vmem:[#allocation2 + $0x8] sm:$0xf]
        %v1342 = vcombine.low %v1338, %v1338
        %v1343 = vcombine.low %v1339, %v1339
        %1344 = vrot.lane.b32.xlu0 %v1342, 91
        %v1345 = vpop.permute.xlu0 %1344
        %1346 = vrot.lane.b32.xlu0 %v1338, 91
        %v1347 = vpop.permute.xlu0 %1346
        %1348 = vrot.lane.b32.xlu0 %v1343, 91
        %v1349 = vpop.permute.xlu0 %1348
        %v1350 = vsel %vm545, %v1345, %v1347
        %v1351 = vsel %vm545, %v1347, %v1349
        %1355 = vst [vmem:[#allocation3 + $0x48] sm:$0xf0] %v1350
        %1356 = vst [vmem:[#allocation3 + $0x50] sm:$0xf0] %v1351
        %1357 = vst.msk [vmem:[#allocation3 + $0x58] sm:$0xf0] %vm429, %v1349
        %v1358 = vld [vmem:[#allocation2] sm:$0xff]
        %v1359 = vld [vmem:[#allocation2 + $0x8] sm:$0xf]
        %v1362 = vcombine.high %v1358, %v1358
        %1363 = vrot.lane.b32.xlu0 %v1358, 90
        %v1364 = vpop.permute.xlu0 %1363
        %1365 = vrot.lane.b32.xlu0 %v1362, 90
        %v1366 = vpop.permute.xlu0 %1365
        %1367 = vrot.lane.b32.xlu0 %v1359, 90
        %v1368 = vpop.permute.xlu0 %1367
        %v1369 = vsel %vm565, %v1364, %v1366
        %v1370 = vsel %vm565, %v1366, %v1368
        %1374 = vst [vmem:[#allocation3 + $0x60] sm:$0xf] %v1369
        %1375 = vst [vmem:[#allocation3 + $0x68] sm:$0xf] %v1370
        %1376 = vst.msk [vmem:[#allocation3 + $0x70] sm:$0xf] %vm407, %v1368
        %v1377 = vld [vmem:[%s5] sm:$0xf]
        %v1378 = vld [vmem:[#allocation3] sm:$0xff]
        %v1379 = vld [vmem:[#allocation3 + $0x8] sm:$0xff]
        %v1380 = vld [vmem:[#allocation3 + $0x10] sm:$0xff]
        %v1381 = vld [vmem:[#allocation3 + $0x18] sm:$0xff]
        %v1382 = vld [vmem:[#allocation3 + $0x20] sm:$0xff]
        %v1383 = vld [vmem:[#allocation3 + $0x28] sm:$0xff]
        %v1384 = vld [vmem:[#allocation3 + $0x30] sm:$0xff]
        %v1385 = vld [vmem:[#allocation3 + $0x38] sm:$0xff]
        %v1386 = vld [vmem:[#allocation3 + $0x40] sm:$0xff]
        %v1387 = vld [vmem:[#allocation3 + $0x48] sm:$0xff]
        %v1388 = vld [vmem:[#allocation3 + $0x50] sm:$0xff]
        %v1389 = vld [vmem:[#allocation3 + $0x58] sm:$0xff]
        %v1390 = vld [vmem:[#allocation3 + $0x60] sm:$0xf]
        %v1391 = vld [vmem:[#allocation3 + $0x68] sm:$0xf]
        %v1392 = vld [vmem:[#allocation3 + $0x70] sm:$0xf]
        %v1393 = vld [vmem:[%s6] sm:$0xf]
        %1395 = vset.pattern.permute.xlu0 0
        %1396 = vperm.xlu0 %1395, %v1393
        %v1397 = vpop.permute.xlu0 %1396
        %v1400 = vsel %vm596, %v1377, 0
        %v1403 = vsel %vm600, %v1390, 0
        %v1406 = vsel %vm600, %v1391, 0
        %v1409 = vsel %vm600, %v1392, 0
        %1411 = vmatprep.subr.mxu0 %v1379
        %1412 = vmatpush1.msra.mxu0 %v1378
        %1413 = vmatprep.subr.mxu0 %v1382
        %1414 = vmatpush1.msra.mxu0 %v1381
        %1415 = vmatprep.subr.mxu0 %v1385
        %1416 = vmatpush1.msra.mxu0 %v1384
        %1417 = vmatprep.subr.mxu0 %v1388
        %1418 = vmatpush1.msra.mxu0 %v1387
        %1419 = vmatprep.subr.mxu0 %v1406
        %1420 = vmatpush1.msra.mxu0 %v1403
        %1421 = vmatprep.subr.mxu0 0.0
        %1422 = vmatpush1.msra.mxu0 0.0
        %1423 = vmatprep.subr.mxu0 0.0
        %1424 = vmatpush1.msra.mxu0 0.0
        %1425 = vmatprep.subr.mxu0 0.0
        %1426 = vmatpush1.msra.mxu0 0.0
        %1427 = vmatprep.subr.mxu0 0.0
        %1428 = vmatpush1.msra.mxu0 0.0
        %1429 = vmatprep.subr.mxu0 0.0
        %1430 = vmatpush1.msra.mxu0 0.0
        %1431 = vmatprep.subr.mxu0 0.0
        %1432 = vmatpush1.msra.mxu0 0.0
        %1433 = vmatprep.subr.mxu0 0.0
        %1434 = vmatpush1.msra.mxu0 0.0
        %1435 = vmatprep.subr.mxu0 0.0
        %1436 = vmatpush1.msra.mxu0 0.0
        %1437 = vmatprep.subr.mxu0 0.0
        %1438 = vmatpush1.msra.mxu0 0.0
        %1439 = vmatprep.subr.mxu0 0.0
        %1440 = vmatpush1.msra.mxu0 0.0
        %1441 = vmatprep.subr.mxu0 0.0
        %1442 = vmatpush1.msra.mxu0 0.0
        %1443 = vmatprep.subr.mxu0 0.0
        %1444 = vmatpush1.msra.mxu0 0.0
        %1445 = vmatprep.subr.mxu0 0.0
        %1446 = vmatpush1.msra.mxu0 0.0
        %1447 = vmatprep.subr.mxu0 0.0
        %1448 = vmatpush1.msra.mxu0 0.0
        %1449 = vmatprep.subr.mxu0 0.0
        %1450 = vmatpush1.msra.mxu0 0.0
        %1451 = vmatprep.subr.mxu0 0.0
        %1452 = vmatpush1.msra.mxu0 0.0
        %1453 = vmatprep.subr.mxu0 0.0
        %1454 = vmatpush1.msra.mxu0 0.0
        %1455 = vmatprep.subr.mxu0 0.0
        %1456 = vmatpush1.msra.mxu0 0.0
        %1457 = vmatprep.subr.mxu0 0.0
        %1458 = vmatpush1.msra.mxu0 0.0
        %1459 = vmatprep.subr.mxu0 0.0
        %1460 = vmatpush1.msra.mxu0 0.0
        %1461 = vmatprep.subr.mxu0 0.0
        %1462 = vmatpush1.msra.mxu0 0.0
        %1463 = vmatprep.subr.mxu0 0.0
        %1464 = vmatpush1.msra.mxu0 0.0
        %1465 = vmatprep.subr.mxu0 0.0
        %1466 = vmatpush1.msra.mxu0 0.0
        %1467 = vmatprep.subr.mxu0 0.0
        %1468 = vmatpush1.msra.mxu0 0.0
        %1469 = vmatprep.subr.mxu0 0.0
        %1470 = vmatpush1.msra.mxu0 0.0
        %1471 = vmatprep.subr.mxu0 0.0
        %1472 = vmatpush1.msra.mxu0 0.0
        %1473 = vmatprep.subr.mxu0 0.0
        %1474 = vmatpush1.msra.mxu0 0.0
        %1475 = vmatprep.mubr.f32.mxu0 0.0
        %1476 = vmatmul.mubr.f32.gmra.mrb[0].mxu0 %v1400
        %v1477 = vpop.f32.mrb[0].mxu0
        %v1478 = vadd.f32 %v1397, %v1477
        %v1479 = vpop.f32.mrb[0].mxu0
        %v1480 = vadd.f32 %v1397, %v1479
        %1481 = vdwg.mxu0
        %1482 = vmatprep.subr.mxu0 0.0
        %1483 = vmatpush1.msra.mxu0 %v1380
        %1484 = vmatprep.subr.mxu0 0.0
        %1485 = vmatpush1.msra.mxu0 %v1383
        %1486 = vmatprep.subr.mxu0 0.0
        %1487 = vmatpush1.msra.mxu0 %v1386
        %1488 = vmatprep.subr.mxu0 0.0
        %1489 = vmatpush1.msra.mxu0 %v1389
        %1490 = vmatprep.subr.mxu0 0.0
        %1491 = vmatpush1.msra.mxu0 %v1409
        %1492 = vmatprep.subr.mxu0 0.0
        %1493 = vmatpush1.msra.mxu0 0.0
        %1494 = vmatprep.subr.mxu0 0.0
        %1495 = vmatpush1.msra.mxu0 0.0
        %1496 = vmatprep.subr.mxu0 0.0
        %1497 = vmatpush1.msra.mxu0 0.0
        %1498 = vmatprep.subr.mxu0 0.0
        %1499 = vmatpush1.msra.mxu0 0.0
        %1500 = vmatprep.subr.mxu0 0.0
        %1501 = vmatpush1.msra.mxu0 0.0
        %1502 = vmatprep.subr.mxu0 0.0
        %1503 = vmatpush1.msra.mxu0 0.0
        %1504 = vmatprep.subr.mxu0 0.0
        %1505 = vmatpush1.msra.mxu0 0.0
        %1506 = vmatprep.subr.mxu0 0.0
        %1507 = vmatpush1.msra.mxu0 0.0
        %1508 = vmatprep.subr.mxu0 0.0
        %1509 = vmatpush1.msra.mxu0 0.0
        %1510 = vmatprep.subr.mxu0 0.0
        %1511 = vmatpush1.msra.mxu0 0.0
        %1512 = vmatprep.subr.mxu0 0.0
        %1513 = vmatpush1.msra.mxu0 0.0
        %1514 = vmatprep.subr.mxu0 0.0
        %1515 = vmatpush1.msra.mxu0 0.0
        %1516 = vmatprep.subr.mxu0 0.0
        %1517 = vmatpush1.msra.mxu0 0.0
        %1518 = vmatprep.subr.mxu0 0.0
        %1519 = vmatpush1.msra.mxu0 0.0
        %1520 = vmatprep.subr.mxu0 0.0
        %1521 = vmatpush1.msra.mxu0 0.0
        %1522 = vmatprep.subr.mxu0 0.0
        %1523 = vmatpush1.msra.mxu0 0.0
        %1524 = vmatprep.subr.mxu0 0.0
        %1525 = vmatpush1.msra.mxu0 0.0
        %1526 = vmatprep.subr.mxu0 0.0
        %1527 = vmatpush1.msra.mxu0 0.0
        %1528 = vmatprep.subr.mxu0 0.0
        %1529 = vmatpush1.msra.mxu0 0.0
        %1530 = vmatprep.subr.mxu0 0.0
        %1531 = vmatpush1.msra.mxu0 0.0
        %1532 = vmatprep.subr.mxu0 0.0
        %1533 = vmatpush1.msra.mxu0 0.0
        %1534 = vmatprep.subr.mxu0 0.0
        %1535 = vmatpush1.msra.mxu0 0.0
        %1536 = vmatprep.subr.mxu0 0.0
        %1537 = vmatpush1.msra.mxu0 0.0
        %1538 = vmatprep.subr.mxu0 0.0
        %1539 = vmatpush1.msra.mxu0 0.0
        %1540 = vmatprep.subr.mxu0 0.0
        %1541 = vmatpush1.msra.mxu0 0.0
        %1542 = vmatprep.subr.mxu0 0.0
        %1543 = vmatpush1.msra.mxu0 0.0
        %1544 = vmatprep.subr.mxu0 0.0
        %1545 = vmatpush1.msra.mxu0 0.0
        %1546 = vmatprep.mubr.f32.mxu0 0.0
        %1547 = vmatmul.mubr.f32.gmra.mrb[0].mxu0 %v1400
        %v1548 = vpop.f32.mrb[0].mxu0
        %v1549 = vadd.f32 %v1397, %v1548
        %v1550 = vpop.f32.mrb[0].mxu0
        %1551 = vdwg.mxu0
        %vm1552 = vcmp.gt.f32.partialorder %v1478, 0.0
        %vm1553 = vcmp.gt.f32.partialorder %v1480, 0.0
        %vm1554 = vcmp.gt.f32.partialorder %v1549, 0.0
        %v1555 = vmin.f32 %v1478, 0.0
        %v1556 = vmin.f32 %v1480, 0.0
        %v1557 = vmin.f32 %v1549, 0.0
        %v1558 = vmul.f32 %v1555, 1.442695
        %v1559 = vpow.pop %v1558
        %v1560 = vmul.f32 %v1556, 1.442695
        %v1561 = vpow.pop %v1560
        %v1562 = vmul.f32 %v1557, 1.442695
        %v1563 = vpow.pop %v1562
        %v1564 = vsub.f32 %v1559, 1.0
        %v1565 = vsub.f32 %v1561, 1.0
        %v1566 = vsub.f32 %v1563, 1.0
        %v1567 = vsel %vm1552, %v1478, %v1564
        %v1568 = vsel %vm1553, %v1480, %v1565
        %v1569 = vsel %vm1554, %v1549, %v1566
        %1571 = vrot.lane.b32.xlu0 %v1567, 109
        %v1572 = vpop.permute.xlu0 %1571
        %1574 = vst.msk [vmem:[%s294] sm:$0xf] %vm328, %v1572
        %1575 = vrot.lane.b32.xlu0 %v1567, 107
        %v1576 = vpop.permute.xlu0 %1575
        %1578 = vst.msk [vmem:[%s294] sm:$0xf] %vm386, %v1576
        %1579 = vrot.lane.b32.xlu0 %v1567, 105
        %v1580 = vpop.permute.xlu0 %1579
        %vm1582 = vcmask 388352
        %1583 = vst.msk [vmem:[%s294] sm:$0xf] %vm1582, %v1580
        %1584 = vrot.lane.b32.xlu0 %v1567, 103
        %v1585 = vpop.permute.xlu0 %1584
        %vm1587 = vcmask 519552
        %1588 = vst.msk [vmem:[%s294] sm:$0xf] %vm1587, %v1585
        %1589 = vrot.lane.b32.xlu0 %v1567, 101
        %v1590 = vpop.permute.xlu0 %1589
        %vm1592 = vcmask 650752
        %1593 = vst.msk [vmem:[%s294] sm:$0xf] %vm1592, %v1590
        %1594 = vrot.lane.b32.xlu0 %v1567, 99
        %v1595 = vpop.permute.xlu0 %1594
        %vm1597 = vcmask 781952
        %1598 = vst.msk [vmem:[%s294] sm:$0xf] %vm1597, %v1595
        %v1600 = vcombine.low %v1567, %v1568
        %1601 = vrot.lane.b32.xlu0 %v1600, 97
        %v1602 = vpop.permute.xlu0 %1601
        %v1603 = vrot.slane %v1602, 4
        %vm1604 = vcmask 793600
        %v1605 = vsel %vm1604, %v1602, %v1603
        %vm1607 = vcmask 913152
        %1608 = vst.msk [vmem:[%s294] sm:$0xf] %vm1607, %v1605
        %1609 = vrot.lane.b32.xlu0 %v1568, 95
        %v1610 = vpop.permute.xlu0 %1609
        %vm1612 = vcmask 1044352
        %1613 = vst.msk [vmem:[%s294] sm:$0xf] %vm1612, %v1610
        %1614 = vrot.lane.b32.xlu0 %v1568, 93
        %v1615 = vpop.permute.xlu0 %1614
        %1617 = vst.msk [vmem:[%s294 + $0x4] sm:$0xf] %vm328, %v1615
        %1618 = vrot.lane.b32.xlu0 %v1568, 91
        %v1619 = vpop.permute.xlu0 %1618
        %1621 = vst.msk [vmem:[%s294 + $0x4] sm:$0xf] %vm386, %v1619
        %1622 = vrot.lane.b32.xlu0 %v1568, 89
        %v1623 = vpop.permute.xlu0 %1622
        %1625 = vst.msk [vmem:[%s294 + $0x4] sm:$0xf] %vm1582, %v1623
        %1626 = vrot.lane.b32.xlu0 %v1568, 87
        %v1627 = vpop.permute.xlu0 %1626
        %1629 = vst.msk [vmem:[%s294 + $0x4] sm:$0xf] %vm1587, %v1627
        %1630 = vrot.lane.b32.xlu0 %v1568, 85
        %v1631 = vpop.permute.xlu0 %1630
        %1633 = vst.msk [vmem:[%s294 + $0x4] sm:$0xf] %vm1592, %v1631
        %v1635 = vcombine.low %v1568, %v1569
        %1636 = vrot.lane.b32.xlu0 %v1635, 83
        %v1637 = vpop.permute.xlu0 %1636
        %v1638 = vrot.slane %v1637, 4
        %vm1639 = vcmask 678912
        %v1640 = vsel %vm1639, %v1637, %v1638
        %1642 = vst.msk [vmem:[%s294 + $0x4] sm:$0xf] %vm1597, %v1640
        %1643 = vrot.lane.b32.xlu0 %v1569, 81
        %v1644 = vpop.permute.xlu0 %1643
        %1646 = vst.msk [vmem:[%s294 + $0x4] sm:$0xf] %vm1607, %v1644
        %1647 = vrot.lane.b32.xlu0 %v1569, 79
        %v1648 = vpop.permute.xlu0 %1647
        %1650 = vst.msk [vmem:[%s294 + $0x4] sm:$0xf] %vm1612, %v1648
        %s1651 = sand.u32 %s184, 1
        %s1652 = scalar_lea.sflag [#allocation6], %s1651
        %s1653 = sand.u32 %s184, 1
        %s1654 = smul.addr %s1653, 8
        %s1655 = scalar_lea.vmem [#allocation7], %s1654
        // Predicated region
        $region53: #{tpu_custom_call.1} parent=47 // pred_check
          %p1656 = pneg %p194
        $region54: #{tpu_custom_call.1} parent=47 // pred_check_branch
          %1658 = sbr.rel (%p1656) target = $region56
        $region55: #{tpu_custom_call.1} parent=47 // pred_region
          %s1660 = ssub.s32 128, 128
          %1661 = vsyncadd %s1652, %s1660
          %s1662 = smul.addr %s24, 2
          %s1663 = smul.addr %s1662, 64
          %s1664 = scalar_lea.hbm %s7, %s1663
          %s1666 = sshll.u32 %s1655, 4
          %s1667 = int_to_ptr.vmem [resolvable:$true] %s1666
          %1669 = dma.vmem_to_hbm [thread:$0]  %s1667, 128, %s1664, %s1652
        $region56: #{tpu_custom_call.1} parent=47 // pred_fallthru
          _
      $region48: #{tpu_custom_call.1} parent=5 // pred_fallthru
        _
      %p1670 = scmp.le.s32.totalorder 2, %s19
      // Predicated region
      $region57: #{tpu_custom_call.1} parent=5 // pred_check
        %p1671 = pneg %p1670
      $region58: #{tpu_custom_call.1} parent=5 // pred_check_branch
        %1673 = sbr.rel (%p1671) target = $region60
      $region59: #{tpu_custom_call.1} parent=5 // pred_region
        %s1674 = ssub.s32 %s19, 2
        // Predicated region
        $region61: #{tpu_custom_call.1} parent=59 // pred_check
          %p1675 = pneg %p200
        $region62: #{tpu_custom_call.1} parent=59 // pred_check_branch
          %1677 = sbr.rel (%p1675) target = $region64
        $region63: #{tpu_custom_call.1} parent=59 // pred_region
          %s1678 = sand.u32 %s185, 1
          %s1679 = scalar_lea.sflag [#allocation6], %s1678
          %s1680 = sand.u32 %s185, 1
          %s1681 = smul.addr %s1680, 8
          %s1682 = scalar_lea.vmem [#allocation7], %s1681
          %1683 = dma.done %s1679, 128
        $region64: #{tpu_custom_call.1} parent=59 // pred_fallthru
          _
      $region60: #{tpu_custom_call.1} parent=5 // pred_fallthru
        _
    $region6: #{tpu_custom_call.1} parent=1 // loop_footer
      %s23 = sadd.s32 1, %s19
    $region7: #{tpu_custom_call.1} parent=1 // loop_footer_branch
      %18 = sbr.rel target = $region3
    $region8: #{tpu_custom_call.1} parent=1 // loop_exit
      _
    %1684 = vsyncpa [#allocation5], 1
    %s1685 = scalar_lea.sflag [#allocation5], 1
    %1686 = vsyncpa %s1685, 1
    %1687 = vsyncpa [#allocation6], 1
    %s1688 = scalar_lea.sflag [#allocation6], 1
    %1689 = vsyncpa %s1688, 1

</llo_original>
